<compile_context>
chip_gen: v5e
topology: v5e:2x2
jax: 0.10.0
libtpu: 0.0.40
codegen_flags: <defaults>
</compile_context>

<pallas_src>
import jax
import jax.numpy as jnp
from jax.experimental import pallas as pl
from jax.experimental.pallas import tpu as pltpu


def _round_up(x, m):
    return (x + m - 1) // m * m


def _lstm_tag_kernel(tok_ref, len_ref, g_ref, whh_ref, wlin_ref, blin_ref,
                     out_ref, h_scr, c_scr, xg_scr):
    """One (batch block, time chunk) grid step.

    tok_ref : (Tc, Bb, 1) int32  time-major token ids for this chunk/block
    len_ref : (Bb, 1)     int32  sequence lengths
    g_ref   : (Vp, 4Hp)   bf16   per-token gate table  emb @ W_ih^T + b
    whh_ref : (Hp, 4Hp)   bf16   recurrent weight W_hh^T (gate-padded columns)
    wlin_ref: (1, Hp)     f32    final linear weight
    blin_ref: (1, 1)      f32    final linear bias
    out_ref : (Bb, 1)     f32    per-sequence score
    h_scr/c_scr : (Bb, Hp) f32   LSTM state, persists across time chunks
    xg_scr  : (Tc, Bb, 4Hp) f32  hoisted per-chunk input projections
    """
    tc = pl.program_id(1)
    n_tc = pl.num_programs(1)
    Tc, Bb, _ = tok_ref.shape
    Hp = h_scr.shape[1]
    Vp = g_ref.shape[0]

    # (Re)initialize the recurrent state at the start of every batch block.
    @pl.when(tc == 0)
    def _():
        h_scr[...] = jnp.zeros_like(h_scr)
        c_scr[...] = jnp.zeros_like(c_scr)

    # ---- Hoisted input projection: ONE large MXU matmul per time chunk ------
    # Embedding lookup + x_t @ W_ih^T + bias fused as a one-hot matmul against
    # the VMEM-resident gate table; only int32 token ids were streamed in.
    tok = tok_ref[...]                                               # (Tc, Bb, 1)
    vids = jax.lax.broadcasted_iota(jnp.int32, (Tc, Bb, Vp), 2)
    onehot = jnp.where(tok == vids, 1.0, 0.0).astype(g_ref.dtype)    # (Tc, Bb, Vp) bf16
    xg = jnp.dot(onehot.reshape(Tc * Bb, Vp), g_ref[...],
                 preferred_element_type=jnp.float32)                 # (Tc*Bb, 4Hp) f32
    xg_scr[...] = xg.reshape(Tc, Bb, 4 * Hp)

    len_v = len_ref[...]                                             # (Bb, 1) i32
    t0 = tc * Tc

    # ---- Serial recurrence: only the small h @ W_hh^T matmul per step -------
    def step(t, carry):
        h = h_scr[...]                                               # (Bb, Hp) f32
        c = c_scr[...]
        gates = xg_scr[t] + jnp.dot(h.astype(whh_ref.dtype), whh_ref[...],
                                    preferred_element_type=jnp.float32)
        # PyTorch gate order i | f | g | o; each slice is 128-lane aligned.
        # (Activations kept f32; bf16 activation pass is a v6e/v7x EUP option.)
        i_g = jax.nn.sigmoid(gates[:, 0 * Hp:1 * Hp])
        f_g = jax.nn.sigmoid(gates[:, 1 * Hp:2 * Hp])
        g_g = jnp.tanh(gates[:, 2 * Hp:3 * Hp])
        o_g = jax.nn.sigmoid(gates[:, 3 * Hp:4 * Hp])
        c_new = f_g * c + i_g * g_g
        h_new = o_g * jnp.tanh(c_new)
        # Packed-sequence semantics: state advances only while t < length[b],
        # so h_scr finally holds h at t = length[b]-1  (== h_last[-1]).
        live = jnp.broadcast_to(len_v > (t0 + t), (Bb, Hp))
        h_scr[...] = jnp.where(live, h_new, h)
        c_scr[...] = jnp.where(live, c_new, c)
        return carry

    # Full unroll for small chunks lets the LLO scheduler overlap step t+1's
    # MXU push with step t's gate math (important on v5e's longer pushes).
    unroll = True if Tc <= 32 else 8
    jax.lax.fori_loop(0, Tc, step, 0, unroll=unroll)

    # ---- Epilogue: Linear(H, 1) as VPU multiply + lane reduction ------------
    @pl.when(tc == n_tc - 1)
    def _():
        h = h_scr[...]
        out_ref[...] = (jnp.sum(h * wlin_ref[...], axis=1, keepdims=True)
                        + blin_ref[...])


def _scatter_gate_cols(w, H, Hp):
    """(R, 4H) gate-stacked (i|f|g|o) -> (R, 4Hp): gate g at columns [g*Hp, g*Hp+H)."""
    out = jnp.zeros((w.shape[0], 4 * Hp), w.dtype)
    for g in range(4):
        out = out.at[:, g * Hp:g * Hp + H].set(w[:, g * H:(g + 1) * H])
    return out


def sequence_tagging_forward(params, token_ids, lengths, time_chunk=None):
    """Equivalent of SequenceTaggingNetPackedSequence.forward(x, h0=None, l=lengths)."""
    B, T = token_ids.shape
    V, E = params["emb"].shape
    H = params["w_hh"].shape[1]                     # w_hh: (4H, H)

    Hp = _round_up(H, 128)                          # per-gate lane-aligned width
    Vp = _round_up(V, 128)                          # vocab padded for the one-hot matmul

    # Batch tile: multiple of 16 (bf16 sublane packing); splits into >=2 blocks
    # once B is large enough so both v7x TensorCores get work.
    Bb = min(128, _round_up(max((B + 1) // 2, 1), 16))
    B_pad = _round_up(B, Bb)

    # Time chunk: bounds the streamed token tile + per-chunk projection scratch
    # and gives the BlockSpec pipeline a next chunk to prefetch during compute.
    if time_chunk is None:
        time_chunk = 32
        while time_chunk > 8 and time_chunk * Bb * (4 * Hp * 4 + Vp * 2) > (6 << 20):
            time_chunk //= 2
    Tc = max(1, min(int(time_chunk), T))
    T_pad = _round_up(T, Tc)

    # ---- weight prep (once per call; would be cached in real use) -----------
    # Fused per-token gate table: G[v] = emb[v] @ W_ih^T + (b_ih + b_hh).
    # Removes both the separate embedding gather and the per-step x @ W_ih.
    # TODO(synk): for large vocabularies (G not VMEM-resident) use a
    # scalar-prefetch / manual-DMA embedding row gather instead.
    b = params["b_ih"] + params["b_hh"]
    g_full = (params["emb"].astype(jnp.float32)
              @ params["w_ih"].T.astype(jnp.float32) + b[None, :])           # (V, 4H)
    g_tbl = jnp.zeros((Vp, 4 * Hp), jnp.float32)
    g_tbl = g_tbl.at[:V].set(_scatter_gate_cols(g_full, H, Hp)).astype(jnp.bfloat16)

    whh_p = jnp.zeros((Hp, 4 * Hp), jnp.float32)
    whh_p = whh_p.at[:H].set(_scatter_gate_cols(params["w_hh"].T, H, Hp))
    whh_p = whh_p.astype(jnp.bfloat16)

    w_lin = jnp.pad(params["w_lin"], ((0, 0), (0, Hp - H))).astype(jnp.float32)  # (1, Hp)
    b_lin = params["b_lin"].reshape(1, 1).astype(jnp.float32)

    # ---- input prep: stream only int32 token ids (time-major) + lengths -----
    tok_tm = jnp.zeros((T_pad, B_pad, 1), jnp.int32)
    tok_tm = tok_tm.at[:T, :B, 0].set(token_ids.T.astype(jnp.int32))
    len_p = jnp.zeros((B_pad, 1), jnp.int32).at[:B, 0].set(lengths.astype(jnp.int32))

    # ---- VMEM budget (double-buffered streamed tokens + resident tables) ----
    bytes_tok = Tc * Bb * 512                       # (Bb,1) i32 rows pad to lane tiles
    bytes_tables = (Vp + Hp) * 4 * Hp * 2 + (Bb + 2) * 512
    bytes_scratch = (2 * Bb * Hp + Tc * Bb * 4 * Hp) * 4
    bytes_onehot = Tc * Bb * Vp * 2
    needed = 2 * (bytes_tok + bytes_tables) + bytes_scratch + bytes_onehot
    vmem_limit = int(min(max(2 * needed, 16 << 20), 48 << 20))    # <=48 MiB: v7x headroom

    grid = (B_pad // Bb, T_pad // Tc)
    out = pl.pallas_call(
        _lstm_tag_kernel,
        out_shape=jax.ShapeDtypeStruct((B_pad, 1), jnp.float32),
        grid_spec=pltpu.PrefetchScalarGridSpec(
            num_scalar_prefetch=0,
            grid=grid,
            in_specs=[
                pl.BlockSpec((Tc, Bb, 1), lambda i, t: (t, i, 0)),   # token ids (streamed)
                pl.BlockSpec((Bb, 1), lambda i, t: (i, 0)),          # lengths
                pl.BlockSpec((Vp, 4 * Hp), lambda i, t: (0, 0)),     # gate table (resident)
                pl.BlockSpec((Hp, 4 * Hp), lambda i, t: (0, 0)),     # W_hh^T   (resident)
                pl.BlockSpec((1, Hp), lambda i, t: (0, 0)),          # linear weight
                pl.BlockSpec((1, 1), lambda i, t: (0, 0)),           # linear bias
            ],
            out_specs=pl.BlockSpec((Bb, 1), lambda i, t: (i, 0)),
            scratch_shapes=[
                pltpu.VMEM((Bb, Hp), jnp.float32),                   # h state
                pltpu.VMEM((Bb, Hp), jnp.float32),                   # c state
                pltpu.VMEM((Tc, Bb, 4 * Hp), jnp.float32),           # chunk projections
            ],
        ),
        compiler_params=pltpu.CompilerParams(
            dimension_semantics=("parallel", "arbitrary"),  # batch parallel, time serial
            vmem_limit_bytes=vmem_limit,
        ),
    )(tok_tm, len_p, g_tbl, whh_p, w_lin, b_lin)
    return out[:B, 0]                               # .squeeze() -> (B,)


def reference_forward(params, token_ids, lengths):
    """Pure-JAX fp32 reference (same math, lax.scan) for correctness check."""
    x = jnp.take(params["emb"], token_ids, axis=0)          # (B, T, E)
    B, T, _ = x.shape
    H = params["w_hh"].shape[1]
    wih, whh = params["w_ih"], params["w_hh"]
    b = params["b_ih"] + params["b_hh"]

    def step(carry, inp):
        h, c = carry
        xt, t = inp
        gates = xt @ wih.T + h @ whh.T + b
        i = jax.nn.sigmoid(gates[:, :H])
        f = jax.nn.sigmoid(gates[:, H:2 * H])
        g = jnp.tanh(gates[:, 2 * H:3 * H])
        o = jax.nn.sigmoid(gates[:, 3 * H:])
        c_new = f * c + i * g
        h_new = o * jnp.tanh(c_new)
        live = (lengths > t)[:, None]
        return (jnp.where(live, h_new, h), jnp.where(live, c_new, c)), None

    h0 = jnp.zeros((B, H), jnp.float32)
    c0 = jnp.zeros((B, H), jnp.float32)
    (h, _), _ = jax.lax.scan(step, (h0, c0),
                             (jnp.transpose(x, (1, 0, 2)), jnp.arange(T)))
    return (h @ params["w_lin"].T + params["b_lin"]).squeeze()


def init_params(key, num_embedding, embedding_dim, hidden_size):
    """Deterministic init matching PyTorch module shapes (not a checkpoint)."""
    ks = jax.random.split(key, 7)
    bound = 1.0 / jnp.sqrt(hidden_size)
    emb = jax.random.normal(ks[0], (num_embedding, embedding_dim), jnp.float32)
    emb = emb.at[0].set(0.0)  # padding_idx=0
    u = lambda k, shape: jax.random.uniform(k, shape, jnp.float32, -bound, bound)
    return {
        "emb": emb,
        "w_ih": u(ks[1], (4 * hidden_size, embedding_dim)),
        "w_hh": u(ks[2], (4 * hidden_size, hidden_size)),
        "b_ih": u(ks[3], (4 * hidden_size,)),
        "b_hh": u(ks[4], (4 * hidden_size,)),
        "w_lin": u(ks[5], (1, hidden_size)),
        "b_lin": u(ks[6], (1,)),
    }


if __name__ == "__main__":
    key = jax.random.PRNGKey(0)
    V, E, H = 100, 32, 32        # num_embedding, embedding_dim, hidden_size
    B, T = 2, 8                  # batch, max sequence length

    k_params, k_tok = jax.random.split(key)
    params = init_params(k_params, V, E, H)

    # token ids (0 is padding), lengths sorted descending like pack_padded_sequence
    lengths = jnp.array([8, 5], dtype=jnp.int32)
    tok = jax.random.randint(k_tok, (B, T), 1, V, dtype=jnp.int32)
    pad_mask = jnp.arange(T)[None, :] < lengths[:, None]
    tok = jnp.where(pad_mask, tok, 0)

    # time_chunk=4 -> two time chunks, exercising the chunked-recurrence path.
    out = jax.block_until_ready(
        sequence_tagging_forward(params, tok, lengths, time_chunk=4))
    ref = jax.block_until_ready(reference_forward(params, tok, lengths))

    assert out.shape == (B,)
    # bf16 MXU path vs fp32 reference -> loosened tolerance.
    assert jnp.allclose(out, ref, atol=5e-2, rtol=5e-2), (out, ref)
    print("KERNEL_OK")
</pallas_src>

<mosaic_0001>
module attributes {stable_mosaic.version = 11 : i64} {
  func.func @_lstm_tag_kernel(%arg0: i32, %arg1: i32, %arg2: memref<4x16x1xi32, #tpu.memory_space<vmem>>, %arg3: memref<16x1xi32, #tpu.memory_space<vmem>>, %arg4: memref<128x512xbf16, #tpu.memory_space<vmem>>, %arg5: memref<128x512xbf16, #tpu.memory_space<vmem>>, %arg6: memref<1x128xf32, #tpu.memory_space<vmem>>, %arg7: memref<1x1xf32, #tpu.memory_space<vmem>>, %arg8: memref<16x1xf32, #tpu.memory_space<vmem>>, %arg9: memref<16x128xf32, #tpu.memory_space<vmem>>, %arg10: memref<16x128xf32, #tpu.memory_space<vmem>>, %arg11: memref<4x16x512xf32, #tpu.memory_space<vmem>>) attributes {dimension_semantics = [#tpu.dimension_semantics<parallel>, #tpu.dimension_semantics<arbitrary>], iteration_bounds = array<i64: 1, 2>, scalar_prefetch = 0 : i64, scratch_operands = 3 : i64, tpu.core_type = #tpu.core_type<tc>, window_params = [{transform_indices = @transform_0, window_bounds = array<i64: 4, 16, 1>}, {transform_indices = @transform_1, window_bounds = array<i64: 16, 1>}, {pipeline_mode = #tpu.pipeline_mode<synchronous>, transform_indices = @transform_2, window_bounds = array<i64: 128, 512>}, {pipeline_mode = #tpu.pipeline_mode<synchronous>, transform_indices = @transform_3, window_bounds = array<i64: 128, 512>}, {pipeline_mode = #tpu.pipeline_mode<synchronous>, transform_indices = @transform_4, window_bounds = array<i64: 1, 128>}, {pipeline_mode = #tpu.pipeline_mode<synchronous>, transform_indices = @transform_5, window_bounds = array<i64: 1, 1>}, {transform_indices = @transform_6, window_bounds = array<i64: 16, 1>}]} {
    %c0_i32 = arith.constant 0 : i32
    %0 = arith.cmpi eq, %arg1, %c0_i32 : i32
    %1 = arith.extui %0 : i1 to i32
    %c0_i32_0 = arith.constant 0 : i32
    %2 = arith.cmpi ne, %1, %c0_i32_0 : i32
    scf.if %2 {
      %cst_80 = arith.constant 0.000000e+00 : f32
      %193 = vector.broadcast %cst_80 : f32 to vector<16x128xf32>
      %c0_81 = arith.constant 0 : index
      %c0_82 = arith.constant 0 : index
      %194 = vector.load %arg9[%c0_81, %c0_82] : memref<16x128xf32, #tpu.memory_space<vmem>>, vector<16x128xf32>
      tpu.vector_store %arg9[%c0_81, %c0_82], %193 {strides = array<i32>} : memref<16x128xf32, #tpu.memory_space<vmem>>, vector<16x128xf32>,
      %cst_83 = arith.constant 0.000000e+00 : f32
      %195 = vector.broadcast %cst_83 : f32 to vector<16x128xf32>
      %c0_84 = arith.constant 0 : index
      %c0_85 = arith.constant 0 : index
      %196 = vector.load %arg10[%c0_84, %c0_85] : memref<16x128xf32, #tpu.memory_space<vmem>>, vector<16x128xf32>
      tpu.vector_store %arg10[%c0_84, %c0_85], %195 {strides = array<i32>} : memref<16x128xf32, #tpu.memory_space<vmem>>, vector<16x128xf32>,
    } else {
    }
    %c0 = arith.constant 0 : index
    %c0_1 = arith.constant 0 : index
    %c0_2 = arith.constant 0 : index
    %3 = vector.load %arg2[%c0, %c0_1, %c0_2] : memref<4x16x1xi32, #tpu.memory_space<vmem>>, vector<4x16x1xi32>
    %4 = tpu.iota {dimensions = array<i32: 2>} : vector<4x16x128xi32>
    %5 = vector.broadcast %3 : vector<4x16x1xi32> to vector<4x16x128xi32>
    %6 = arith.cmpi eq, %5, %4 : vector<4x16x128xi32>
    %cst = arith.constant 1.000000e+00 : f32
    %cst_3 = arith.constant 0.000000e+00 : f32
    %7 = vector.broadcast %cst : f32 to vector<4x16x128xf32>
    %8 = vector.broadcast %cst_3 : f32 to vector<4x16x128xf32>
    %9 = arith.select %6, %7, %8 : vector<4x16x128xi1>, vector<4x16x128xf32>
    %10 = arith.truncf %9 : vector<4x16x128xf32> to vector<4x16x128xbf16>
    %11 = vector.shape_cast %10 : vector<4x16x128xbf16> to vector<64x128xbf16>
    %c0_4 = arith.constant 0 : index
    %c0_5 = arith.constant 0 : index
    %12 = vector.load %arg4[%c0_4, %c0_5] : memref<128x512xbf16, #tpu.memory_space<vmem>>, vector<128x512xbf16>
    %cst_6 = arith.constant dense<0.000000e+00> : vector<64x512xf32>
    %13 = tpu.matmul %11, %12, %cst_6 {dimension_numbers = #tpu.dot_dimension_numbers<[1], [0], [0], [1], [0, 0, 1, 1], [], []>} : vector<64x128xbf16>, vector<128x512xbf16>, vector<64x512xf32> -> vector<64x512xf32>
    %14 = vector.shape_cast %13 : vector<64x512xf32> to vector<4x16x512xf32>
    %c0_7 = arith.constant 0 : index
    %c0_8 = arith.constant 0 : index
    %c0_9 = arith.constant 0 : index
    %15 = vector.load %arg11[%c0_7, %c0_8, %c0_9] : memref<4x16x512xf32, #tpu.memory_space<vmem>>, vector<4x16x512xf32>
    tpu.vector_store %arg11[%c0_7, %c0_8, %c0_9], %14 {strides = array<i32>} : memref<4x16x512xf32, #tpu.memory_space<vmem>>, vector<4x16x512xf32>,
    %c0_10 = arith.constant 0 : index
    %c0_11 = arith.constant 0 : index
    %16 = vector.load %arg3[%c0_10, %c0_11] : memref<16x1xi32, #tpu.memory_space<vmem>>, vector<16x1xi32>
    %c4_i32 = arith.constant 4 : i32
    %17 = arith.muli %arg1, %c4_i32 : i32
    %c0_i32_12 = arith.constant 0 : i32
    %c0_13 = arith.constant 0 : index
    %c0_14 = arith.constant 0 : index
    %18 = vector.load %arg9[%c0_13, %c0_14] : memref<16x128xf32, #tpu.memory_space<vmem>>, vector<16x128xf32>
    %c0_15 = arith.constant 0 : index
    %c0_16 = arith.constant 0 : index
    %19 = vector.load %arg10[%c0_15, %c0_16] : memref<16x128xf32, #tpu.memory_space<vmem>>, vector<16x128xf32>
    %20 = arith.index_cast %c0_i32_12 : i32 to index
    %c0_17 = arith.constant 0 : index
    %c0_18 = arith.constant 0 : index
    %21 = vector.load %arg11[%20, %c0_17, %c0_18] : memref<4x16x512xf32, #tpu.memory_space<vmem>>, vector<1x16x512xf32>
    %22 = vector.shape_cast %21 : vector<1x16x512xf32> to vector<16x512xf32>
    %23 = arith.truncf %18 : vector<16x128xf32> to vector<16x128xbf16>
    %c0_19 = arith.constant 0 : index
    %c0_20 = arith.constant 0 : index
    %24 = vector.load %arg5[%c0_19, %c0_20] : memref<128x512xbf16, #tpu.memory_space<vmem>>, vector<128x512xbf16>
    %cst_21 = arith.constant dense<0.000000e+00> : vector<16x512xf32>
    %25 = tpu.matmul %23, %24, %cst_21 {dimension_numbers = #tpu.dot_dimension_numbers<[1], [0], [0], [1], [0, 0, 1, 1], [], []>} : vector<16x128xbf16>, vector<128x512xbf16>, vector<16x512xf32> -> vector<16x512xf32>
    %26 = arith.addf %22, %25 : vector<16x512xf32>
    %27 = vector.extract_strided_slice %26 {offsets = [0, 0], sizes = [16, 128], strides = [1, 1]} : vector<16x512xf32> to vector<16x128xf32>
    %28 = arith.negf %27 : vector<16x128xf32>
    %29 = math.exp %28 : vector<16x128xf32>
    %cst_22 = arith.constant 1.000000e+00 : f32
    %30 = vector.broadcast %cst_22 : f32 to vector<16x128xf32>
    %31 = arith.addf %30, %29 : vector<16x128xf32>
    %32 = arith.divf %30, %31 : vector<16x128xf32>
    %33 = vector.extract_strided_slice %26 {offsets = [0, 128], sizes = [16, 128], strides = [1, 1]} : vector<16x512xf32> to vector<16x128xf32>
    %34 = arith.negf %33 : vector<16x128xf32>
    %35 = math.exp %34 : vector<16x128xf32>
    %cst_23 = arith.constant 1.000000e+00 : f32
    %36 = vector.broadcast %cst_23 : f32 to vector<16x128xf32>
    %37 = arith.addf %36, %35 : vector<16x128xf32>
    %38 = arith.divf %36, %37 : vector<16x128xf32>
    %39 = vector.extract_strided_slice %26 {offsets = [0, 256], sizes = [16, 128], strides = [1, 1]} : vector<16x512xf32> to vector<16x128xf32>
    %40 = math.tanh %39 : vector<16x128xf32>
    %41 = vector.extract_strided_slice %26 {offsets = [0, 384], sizes = [16, 128], strides = [1, 1]} : vector<16x512xf32> to vector<16x128xf32>
    %42 = arith.negf %41 : vector<16x128xf32>
    %43 = math.exp %42 : vector<16x128xf32>
    %cst_24 = arith.constant 1.000000e+00 : f32
    %44 = vector.broadcast %cst_24 : f32 to vector<16x128xf32>
    %45 = arith.addf %44, %43 : vector<16x128xf32>
    %46 = arith.divf %44, %45 : vector<16x128xf32>
    %47 = arith.mulf %38, %19 : vector<16x128xf32>
    %48 = arith.mulf %32, %40 : vector<16x128xf32>
    %49 = arith.addf %47, %48 : vector<16x128xf32>
    %50 = math.tanh %49 : vector<16x128xf32>
    %51 = arith.mulf %46, %50 : vector<16x128xf32>
    %52 = arith.addi %17, %c0_i32_12 : i32
    %53 = vector.broadcast %52 : i32 to vector<16x1xi32>
    %54 = arith.cmpi sgt, %16, %53 : vector<16x1xi32>
    %55 = vector.shape_cast %54 : vector<16x1xi1> to vector<16x1xi1>
    %56 = vector.broadcast %55 : vector<16x1xi1> to vector<16x128xi1>
    %57 = arith.select %56, %51, %18 : vector<16x128xi1>, vector<16x128xf32>
    %c0_25 = arith.constant 0 : index
    %c0_26 = arith.constant 0 : index
    %58 = vector.load %arg9[%c0_25, %c0_26] : memref<16x128xf32, #tpu.memory_space<vmem>>, vector<16x128xf32>
    tpu.vector_store %arg9[%c0_25, %c0_26], %57 {strides = array<i32>} : memref<16x128xf32, #tpu.memory_space<vmem>>, vector<16x128xf32>,
    %59 = arith.select %56, %49, %19 : vector<16x128xi1>, vector<16x128xf32>
    %c0_27 = arith.constant 0 : index
    %c0_28 = arith.constant 0 : index
    %60 = vector.load %arg10[%c0_27, %c0_28] : memref<16x128xf32, #tpu.memory_space<vmem>>, vector<16x128xf32>
    tpu.vector_store %arg10[%c0_27, %c0_28], %59 {strides = array<i32>} : memref<16x128xf32, #tpu.memory_space<vmem>>, vector<16x128xf32>,
    %c1_i32 = arith.constant 1 : i32
    %c0_29 = arith.constant 0 : index
    %c0_30 = arith.constant 0 : index
    %61 = vector.load %arg9[%c0_29, %c0_30] : memref<16x128xf32, #tpu.memory_space<vmem>>, vector<16x128xf32>
    %c0_31 = arith.constant 0 : index
    %c0_32 = arith.constant 0 : index
    %62 = vector.load %arg10[%c0_31, %c0_32] : memref<16x128xf32, #tpu.memory_space<vmem>>, vector<16x128xf32>
    %63 = arith.index_cast %c1_i32 : i32 to index
    %c0_33 = arith.constant 0 : index
    %c0_34 = arith.constant 0 : index
    %64 = vector.load %arg11[%63, %c0_33, %c0_34] : memref<4x16x512xf32, #tpu.memory_space<vmem>>, vector<1x16x512xf32>
    %65 = vector.shape_cast %64 : vector<1x16x512xf32> to vector<16x512xf32>
    %66 = arith.truncf %61 : vector<16x128xf32> to vector<16x128xbf16>
    %c0_35 = arith.constant 0 : index
    %c0_36 = arith.constant 0 : index
    %67 = vector.load %arg5[%c0_35, %c0_36] : memref<128x512xbf16, #tpu.memory_space<vmem>>, vector<128x512xbf16>
    %cst_37 = arith.constant dense<0.000000e+00> : vector<16x512xf32>
    %68 = tpu.matmul %66, %67, %cst_37 {dimension_numbers = #tpu.dot_dimension_numbers<[1], [0], [0], [1], [0, 0, 1, 1], [], []>} : vector<16x128xbf16>, vector<128x512xbf16>, vector<16x512xf32> -> vector<16x512xf32>
    %69 = arith.addf %65, %68 : vector<16x512xf32>
    %70 = vector.extract_strided_slice %69 {offsets = [0, 0], sizes = [16, 128], strides = [1, 1]} : vector<16x512xf32> to vector<16x128xf32>
    %71 = arith.negf %70 : vector<16x128xf32>
    %72 = math.exp %71 : vector<16x128xf32>
    %cst_38 = arith.constant 1.000000e+00 : f32
    %73 = vector.broadcast %cst_38 : f32 to vector<16x128xf32>
    %74 = arith.addf %73, %72 : vector<16x128xf32>
    %75 = arith.divf %73, %74 : vector<16x128xf32>
    %76 = vector.extract_strided_slice %69 {offsets = [0, 128], sizes = [16, 128], strides = [1, 1]} : vector<16x512xf32> to vector<16x128xf32>
    %77 = arith.negf %76 : vector<16x128xf32>
    %78 = math.exp %77 : vector<16x128xf32>
    %cst_39 = arith.constant 1.000000e+00 : f32
    %79 = vector.broadcast %cst_39 : f32 to vector<16x128xf32>
    %80 = arith.addf %79, %78 : vector<16x128xf32>
    %81 = arith.divf %79, %80 : vector<16x128xf32>
    %82 = vector.extract_strided_slice %69 {offsets = [0, 256], sizes = [16, 128], strides = [1, 1]} : vector<16x512xf32> to vector<16x128xf32>
    %83 = math.tanh %82 : vector<16x128xf32>
    %84 = vector.extract_strided_slice %69 {offsets = [0, 384], sizes = [16, 128], strides = [1, 1]} : vector<16x512xf32> to vector<16x128xf32>
    %85 = arith.negf %84 : vector<16x128xf32>
    %86 = math.exp %85 : vector<16x128xf32>
    %cst_40 = arith.constant 1.000000e+00 : f32
    %87 = vector.broadcast %cst_40 : f32 to vector<16x128xf32>
    %88 = arith.addf %87, %86 : vector<16x128xf32>
    %89 = arith.divf %87, %88 : vector<16x128xf32>
    %90 = arith.mulf %81, %62 : vector<16x128xf32>
    %91 = arith.mulf %75, %83 : vector<16x128xf32>
    %92 = arith.addf %90, %91 : vector<16x128xf32>
    %93 = math.tanh %92 : vector<16x128xf32>
    %94 = arith.mulf %89, %93 : vector<16x128xf32>
    %95 = arith.addi %17, %c1_i32 : i32
    %96 = vector.broadcast %95 : i32 to vector<16x1xi32>
    %97 = arith.cmpi sgt, %16, %96 : vector<16x1xi32>
    %98 = vector.shape_cast %97 : vector<16x1xi1> to vector<16x1xi1>
    %99 = vector.broadcast %98 : vector<16x1xi1> to vector<16x128xi1>
    %100 = arith.select %99, %94, %61 : vector<16x128xi1>, vector<16x128xf32>
    %c0_41 = arith.constant 0 : index
    %c0_42 = arith.constant 0 : index
    %101 = vector.load %arg9[%c0_41, %c0_42] : memref<16x128xf32, #tpu.memory_space<vmem>>, vector<16x128xf32>
    tpu.vector_store %arg9[%c0_41, %c0_42], %100 {strides = array<i32>} : memref<16x128xf32, #tpu.memory_space<vmem>>, vector<16x128xf32>,
    %102 = arith.select %99, %92, %62 : vector<16x128xi1>, vector<16x128xf32>
    %c0_43 = arith.constant 0 : index
    %c0_44 = arith.constant 0 : index
    %103 = vector.load %arg10[%c0_43, %c0_44] : memref<16x128xf32, #tpu.memory_space<vmem>>, vector<16x128xf32>
    tpu.vector_store %arg10[%c0_43, %c0_44], %102 {strides = array<i32>} : memref<16x128xf32, #tpu.memory_space<vmem>>, vector<16x128xf32>,
    %c2_i32 = arith.constant 2 : i32
    %c0_45 = arith.constant 0 : index
    %c0_46 = arith.constant 0 : index
    %104 = vector.load %arg9[%c0_45, %c0_46] : memref<16x128xf32, #tpu.memory_space<vmem>>, vector<16x128xf32>
    %c0_47 = arith.constant 0 : index
    %c0_48 = arith.constant 0 : index
    %105 = vector.load %arg10[%c0_47, %c0_48] : memref<16x128xf32, #tpu.memory_space<vmem>>, vector<16x128xf32>
    %106 = arith.index_cast %c2_i32 : i32 to index
    %c0_49 = arith.constant 0 : index
    %c0_50 = arith.constant 0 : index
    %107 = vector.load %arg11[%106, %c0_49, %c0_50] : memref<4x16x512xf32, #tpu.memory_space<vmem>>, vector<1x16x512xf32>
    %108 = vector.shape_cast %107 : vector<1x16x512xf32> to vector<16x512xf32>
    %109 = arith.truncf %104 : vector<16x128xf32> to vector<16x128xbf16>
    %c0_51 = arith.constant 0 : index
    %c0_52 = arith.constant 0 : index
    %110 = vector.load %arg5[%c0_51, %c0_52] : memref<128x512xbf16, #tpu.memory_space<vmem>>, vector<128x512xbf16>
    %cst_53 = arith.constant dense<0.000000e+00> : vector<16x512xf32>
    %111 = tpu.matmul %109, %110, %cst_53 {dimension_numbers = #tpu.dot_dimension_numbers<[1], [0], [0], [1], [0, 0, 1, 1], [], []>} : vector<16x128xbf16>, vector<128x512xbf16>, vector<16x512xf32> -> vector<16x512xf32>
    %112 = arith.addf %108, %111 : vector<16x512xf32>
    %113 = vector.extract_strided_slice %112 {offsets = [0, 0], sizes = [16, 128], strides = [1, 1]} : vector<16x512xf32> to vector<16x128xf32>
    %114 = arith.negf %113 : vector<16x128xf32>
    %115 = math.exp %114 : vector<16x128xf32>
    %cst_54 = arith.constant 1.000000e+00 : f32
    %116 = vector.broadcast %cst_54 : f32 to vector<16x128xf32>
    %117 = arith.addf %116, %115 : vector<16x128xf32>
    %118 = arith.divf %116, %117 : vector<16x128xf32>
    %119 = vector.extract_strided_slice %112 {offsets = [0, 128], sizes = [16, 128], strides = [1, 1]} : vector<16x512xf32> to vector<16x128xf32>
    %120 = arith.negf %119 : vector<16x128xf32>
    %121 = math.exp %120 : vector<16x128xf32>
    %cst_55 = arith.constant 1.000000e+00 : f32
    %122 = vector.broadcast %cst_55 : f32 to vector<16x128xf32>
    %123 = arith.addf %122, %121 : vector<16x128xf32>
    %124 = arith.divf %122, %123 : vector<16x128xf32>
    %125 = vector.extract_strided_slice %112 {offsets = [0, 256], sizes = [16, 128], strides = [1, 1]} : vector<16x512xf32> to vector<16x128xf32>
    %126 = math.tanh %125 : vector<16x128xf32>
    %127 = vector.extract_strided_slice %112 {offsets = [0, 384], sizes = [16, 128], strides = [1, 1]} : vector<16x512xf32> to vector<16x128xf32>
    %128 = arith.negf %127 : vector<16x128xf32>
    %129 = math.exp %128 : vector<16x128xf32>
    %cst_56 = arith.constant 1.000000e+00 : f32
    %130 = vector.broadcast %cst_56 : f32 to vector<16x128xf32>
    %131 = arith.addf %130, %129 : vector<16x128xf32>
    %132 = arith.divf %130, %131 : vector<16x128xf32>
    %133 = arith.mulf %124, %105 : vector<16x128xf32>
    %134 = arith.mulf %118, %126 : vector<16x128xf32>
    %135 = arith.addf %133, %134 : vector<16x128xf32>
    %136 = math.tanh %135 : vector<16x128xf32>
    %137 = arith.mulf %132, %136 : vector<16x128xf32>
    %138 = arith.addi %17, %c2_i32 : i32
    %139 = vector.broadcast %138 : i32 to vector<16x1xi32>
    %140 = arith.cmpi sgt, %16, %139 : vector<16x1xi32>
    %141 = vector.shape_cast %140 : vector<16x1xi1> to vector<16x1xi1>
    %142 = vector.broadcast %141 : vector<16x1xi1> to vector<16x128xi1>
    %143 = arith.select %142, %137, %104 : vector<16x128xi1>, vector<16x128xf32>
    %c0_57 = arith.constant 0 : index
    %c0_58 = arith.constant 0 : index
    %144 = vector.load %arg9[%c0_57, %c0_58] : memref<16x128xf32, #tpu.memory_space<vmem>>, vector<16x128xf32>
    tpu.vector_store %arg9[%c0_57, %c0_58], %143 {strides = array<i32>} : memref<16x128xf32, #tpu.memory_space<vmem>>, vector<16x128xf32>,
    %145 = arith.select %142, %135, %105 : vector<16x128xi1>, vector<16x128xf32>
    %c0_59 = arith.constant 0 : index
    %c0_60 = arith.constant 0 : index
    %146 = vector.load %arg10[%c0_59, %c0_60] : memref<16x128xf32, #tpu.memory_space<vmem>>, vector<16x128xf32>
    tpu.vector_store %arg10[%c0_59, %c0_60], %145 {strides = array<i32>} : memref<16x128xf32, #tpu.memory_space<vmem>>, vector<16x128xf32>,
    %c3_i32 = arith.constant 3 : i32
    %c0_61 = arith.constant 0 : index
    %c0_62 = arith.constant 0 : index
    %147 = vector.load %arg9[%c0_61, %c0_62] : memref<16x128xf32, #tpu.memory_space<vmem>>, vector<16x128xf32>
    %c0_63 = arith.constant 0 : index
    %c0_64 = arith.constant 0 : index
    %148 = vector.load %arg10[%c0_63, %c0_64] : memref<16x128xf32, #tpu.memory_space<vmem>>, vector<16x128xf32>
    %149 = arith.index_cast %c3_i32 : i32 to index
    %c0_65 = arith.constant 0 : index
    %c0_66 = arith.constant 0 : index
    %150 = vector.load %arg11[%149, %c0_65, %c0_66] : memref<4x16x512xf32, #tpu.memory_space<vmem>>, vector<1x16x512xf32>
    %151 = vector.shape_cast %150 : vector<1x16x512xf32> to vector<16x512xf32>
    %152 = arith.truncf %147 : vector<16x128xf32> to vector<16x128xbf16>
    %c0_67 = arith.constant 0 : index
    %c0_68 = arith.constant 0 : index
    %153 = vector.load %arg5[%c0_67, %c0_68] : memref<128x512xbf16, #tpu.memory_space<vmem>>, vector<128x512xbf16>
    %cst_69 = arith.constant dense<0.000000e+00> : vector<16x512xf32>
    %154 = tpu.matmul %152, %153, %cst_69 {dimension_numbers = #tpu.dot_dimension_numbers<[1], [0], [0], [1], [0, 0, 1, 1], [], []>} : vector<16x128xbf16>, vector<128x512xbf16>, vector<16x512xf32> -> vector<16x512xf32>
    %155 = arith.addf %151, %154 : vector<16x512xf32>
    %156 = vector.extract_strided_slice %155 {offsets = [0, 0], sizes = [16, 128], strides = [1, 1]} : vector<16x512xf32> to vector<16x128xf32>
    %157 = arith.negf %156 : vector<16x128xf32>
    %158 = math.exp %157 : vector<16x128xf32>
    %cst_70 = arith.constant 1.000000e+00 : f32
    %159 = vector.broadcast %cst_70 : f32 to vector<16x128xf32>
    %160 = arith.addf %159, %158 : vector<16x128xf32>
    %161 = arith.divf %159, %160 : vector<16x128xf32>
    %162 = vector.extract_strided_slice %155 {offsets = [0, 128], sizes = [16, 128], strides = [1, 1]} : vector<16x512xf32> to vector<16x128xf32>
    %163 = arith.negf %162 : vector<16x128xf32>
    %164 = math.exp %163 : vector<16x128xf32>
    %cst_71 = arith.constant 1.000000e+00 : f32
    %165 = vector.broadcast %cst_71 : f32 to vector<16x128xf32>
    %166 = arith.addf %165, %164 : vector<16x128xf32>
    %167 = arith.divf %165, %166 : vector<16x128xf32>
    %168 = vector.extract_strided_slice %155 {offsets = [0, 256], sizes = [16, 128], strides = [1, 1]} : vector<16x512xf32> to vector<16x128xf32>
    %169 = math.tanh %168 : vector<16x128xf32>
    %170 = vector.extract_strided_slice %155 {offsets = [0, 384], sizes = [16, 128], strides = [1, 1]} : vector<16x512xf32> to vector<16x128xf32>
    %171 = arith.negf %170 : vector<16x128xf32>
    %172 = math.exp %171 : vector<16x128xf32>
    %cst_72 = arith.constant 1.000000e+00 : f32
    %173 = vector.broadcast %cst_72 : f32 to vector<16x128xf32>
    %174 = arith.addf %173, %172 : vector<16x128xf32>
    %175 = arith.divf %173, %174 : vector<16x128xf32>
    %176 = arith.mulf %167, %148 : vector<16x128xf32>
    %177 = arith.mulf %161, %169 : vector<16x128xf32>
    %178 = arith.addf %176, %177 : vector<16x128xf32>
    %179 = math.tanh %178 : vector<16x128xf32>
    %180 = arith.mulf %175, %179 : vector<16x128xf32>
    %181 = arith.addi %17, %c3_i32 : i32
    %182 = vector.broadcast %181 : i32 to vector<16x1xi32>
    %183 = arith.cmpi sgt, %16, %182 : vector<16x1xi32>
    %184 = vector.shape_cast %183 : vector<16x1xi1> to vector<16x1xi1>
    %185 = vector.broadcast %184 : vector<16x1xi1> to vector<16x128xi1>
    %186 = arith.select %185, %180, %147 : vector<16x128xi1>, vector<16x128xf32>
    %c0_73 = arith.constant 0 : index
    %c0_74 = arith.constant 0 : index
    %187 = vector.load %arg9[%c0_73, %c0_74] : memref<16x128xf32, #tpu.memory_space<vmem>>, vector<16x128xf32>
    tpu.vector_store %arg9[%c0_73, %c0_74], %186 {strides = array<i32>} : memref<16x128xf32, #tpu.memory_space<vmem>>, vector<16x128xf32>,
    %188 = arith.select %185, %178, %148 : vector<16x128xi1>, vector<16x128xf32>
    %c0_75 = arith.constant 0 : index
    %c0_76 = arith.constant 0 : index
    %189 = vector.load %arg10[%c0_75, %c0_76] : memref<16x128xf32, #tpu.memory_space<vmem>>, vector<16x128xf32>
    tpu.vector_store %arg10[%c0_75, %c0_76], %188 {strides = array<i32>} : memref<16x128xf32, #tpu.memory_space<vmem>>, vector<16x128xf32>,
    %c4_i32_77 = arith.constant 4 : i32
    %c1_i32_78 = arith.constant 1 : i32
    %190 = arith.cmpi eq, %arg1, %c1_i32_78 : i32
    %191 = arith.extui %190 : i1 to i32
    %c0_i32_79 = arith.constant 0 : i32
    %192 = arith.cmpi ne, %191, %c0_i32_79 : i32
    scf.if %192 {
      %c0_80 = arith.constant 0 : index
      %c0_81 = arith.constant 0 : index
      %193 = vector.load %arg9[%c0_80, %c0_81] : memref<16x128xf32, #tpu.memory_space<vmem>>, vector<16x128xf32>
      %c0_82 = arith.constant 0 : index
      %c0_83 = arith.constant 0 : index
      %194 = vector.load %arg6[%c0_82, %c0_83] : memref<1x128xf32, #tpu.memory_space<vmem>>, vector<1x128xf32>
      %195 = vector.broadcast %194 : vector<1x128xf32> to vector<16x128xf32>
      %196 = arith.mulf %193, %195 : vector<16x128xf32>
      %cst_84 = arith.constant dense<0.000000e+00> : vector<16xf32>
      %197 = vector.multi_reduction <add>, %196, %cst_84 [1] : vector<16x128xf32> to vector<16xf32>
      %198 = vector.shape_cast %197 : vector<16xf32> to vector<16x1xf32>
      %c0_85 = arith.constant 0 : index
      %c0_86 = arith.constant 0 : index
      %199 = vector.load %arg7[%c0_85, %c0_86] : memref<1x1xf32, #tpu.memory_space<vmem>>, vector<1x1xf32>
      %200 = vector.broadcast %199 : vector<1x1xf32> to vector<16x1xf32>
      %201 = arith.addf %198, %200 : vector<16x1xf32>
      %c0_87 = arith.constant 0 : index
      %c0_88 = arith.constant 0 : index
      %202 = vector.load %arg8[%c0_87, %c0_88] : memref<16x1xf32, #tpu.memory_space<vmem>>, vector<16x1xf32>
      tpu.vector_store %arg8[%c0_87, %c0_88], %201 {strides = array<i32>} : memref<16x1xf32, #tpu.memory_space<vmem>>, vector<16x1xf32>,
    } else {
    }
    return
  }
  func.func @transform_0(%arg0: i32, %arg1: i32) -> (i32, i32, i32) {
    %c0_i32 = arith.constant 0 : i32
    %c0_i32_0 = arith.constant 0 : i32
    return %arg1, %arg0, %c0_i32 : i32, i32, i32
  }
  func.func @transform_1(%arg0: i32, %arg1: i32) -> (i32, i32) {
    %c0_i32 = arith.constant 0 : i32
    %c0_i32_0 = arith.constant 0 : i32
    return %arg0, %c0_i32 : i32, i32
  }
  func.func @transform_2(%arg0: i32, %arg1: i32) -> (i32, i32) {
    %c0_i32 = arith.constant 0 : i32
    %c0_i32_0 = arith.constant 0 : i32
    %c0_i32_1 = arith.constant 0 : i32
    return %c0_i32, %c0_i32_0 : i32, i32
  }
  func.func @transform_3(%arg0: i32, %arg1: i32) -> (i32, i32) {
    %c0_i32 = arith.constant 0 : i32
    %c0_i32_0 = arith.constant 0 : i32
    %c0_i32_1 = arith.constant 0 : i32
    return %c0_i32, %c0_i32_0 : i32, i32
  }
  func.func @transform_4(%arg0: i32, %arg1: i32) -> (i32, i32) {
    %c0_i32 = arith.constant 0 : i32
    %c0_i32_0 = arith.constant 0 : i32
    %c0_i32_1 = arith.constant 0 : i32
    return %c0_i32, %c0_i32_0 : i32, i32
  }
  func.func @transform_5(%arg0: i32, %arg1: i32) -> (i32, i32) {
    %c0_i32 = arith.constant 0 : i32
    %c0_i32_0 = arith.constant 0 : i32
    %c0_i32_1 = arith.constant 0 : i32
    return %c0_i32, %c0_i32_0 : i32, i32
  }
  func.func @transform_6(%arg0: i32, %arg1: i32) -> (i32, i32) {
    %c0_i32 = arith.constant 0 : i32
    %c0_i32_0 = arith.constant 0 : i32
    return %arg0, %c0_i32 : i32, i32
  }
}

</mosaic_0001>

<llo_original>
// kernel: tpu_custom_call.1
$region0: #{tpu_custom_call.1}
  #allocation0 [shape = 'u32[]', space=smem, size = 0x4, offset = 0x4, fixed_abs, tag = 'smem constant byte address 0x4 - core index']
  #allocation1 [shape = 'u32[72,128]{1,0:T(1,128)}', space=vmem, size = 0x9000, scoped, tag = 'internal scratch']
  #allocation2 [shape = 'f32[16,128]{1,0:T(8,128)}', space=vmem, size = 0x2000, scoped, tag = 'scratch operand']
  #allocation3 [shape = 'f32[16,128]{1,0:T(8,128)}', space=vmem, size = 0x2000, scoped, tag = 'scratch operand']
  #allocation4 [shape = 'f32[4,16,512]{2,1,0:T(8,128)}', space=vmem, size = 0x20000, scoped, tag = 'scratch operand']
  #allocation5 [shape = 'f32[1,1]{1,0:T(1,128)S(1)}', space=vmem, size = 0x200, scoped, tag = 'scoped memory for tpu_custom_call.1']
  %s0 = inlined_call_operand.vmem [shape: s32[8,16,1], index: 0, kind: input, shape index: {}]
  %s1 = inlined_call_operand.vmem [shape: s32[16,1], index: 1, kind: input, shape index: {}]
  %s2 = inlined_call_operand.hbm [shape: bf16[128,512], index: 2, kind: input, shape index: {}]
  %s3 = inlined_call_operand.hbm [shape: bf16[128,512], index: 3, kind: input, shape index: {}]
  %s4 = inlined_call_operand.vmem [shape: f32[1,128], index: 4, kind: input, shape index: {}]
  %s5 = inlined_call_operand.<no memory space> [shape: f32[1,1], index: 5, kind: input, shape index: {}]
  %s6 = inlined_call_operand.vmem [shape: f32[16,1], index: 6, kind: output, shape index: {}]
  %s7 = sld [smem:[#allocation0]]
  $region73: #{tpu_custom_call.1} parent=0
    _
  %s9 = ssub.s32 1, %s7
  %s10 = scalar_select 0, %s9, %s7
  %v11 = vstv %s5
  %12 = vst [vmem:[#allocation5] sm:$0x1] %v11
  $region1: #{tpu_custom_call.1} parent=0
    #allocation6 [shape = 'u8[131072]{0}', space=vmem, size = 0x20000, scoped, tag = 'input window, operand 2, single buffered']
    #allocation7 [shape = 's32[2]{0}', space=sflag, size = 0x8, scoped, tag = 'scoped memory for tpu_custom_call.1']
    #allocation8 [shape = 'u8[131072]{0}', space=vmem, size = 0x20000, scoped, tag = 'input window, operand 3, single buffered']
    #allocation9 [shape = 's32[1]{0}', space=sflag, size = 0x4, scoped, tag = 'scoped memory for tpu_custom_call.1']
    %13 = vsyncpa [#allocation7], 0
    %14 = vsyncpa [#allocation9], 0
    loop: start=0, step=1, limit=4
    $region2: #{tpu_custom_call.1} parent=1 // loop_pre_header
      _
    $region3: #{tpu_custom_call.1} parent=1 // loop_header
      %s16 = sphi 0, %s20
      %p17 = scmp.ge.s32.totalorder %s16, 4
      %s23 = sphi 0, %s35
      %s24 = sphi 0, %s31
      %s25 = sphi 0, %s23
      %s26 = sphi 0, %s24
      %s27 = sphi 0, %s25
      %s28 = sphi 0, %s26
      %s40 = sphi 0, %s42
      %s43 = sphi 0, %s40
      %s44 = sphi 0, %s43
      %s60 = sphi 0, %s44
      %s66 = sphi 0, %s68
      %s69 = sphi 0, %s66
      %s70 = sphi 0, %s69
      %s86 = sphi 0, %s70
      %s90 = sphi 0, %s90
      %s92 = sphi 0, %s90
      %s93 = sphi 0, %s92
      %s107 = sphi 0, %s93
      %s111 = sphi 0, %s111
      %s113 = sphi 0, %s111
      %s114 = sphi 0, %s113
      %s128 = sphi 0, %s114
      %s132 = sphi 0, %s132
      %s134 = sphi 0, %s132
      %s135 = sphi 0, %s134
      %s149 = sphi 0, %s135
      %s153 = sphi 0, %s153
      %s155 = sphi 0, %s153
      %s156 = sphi 0, %s155
      %s170 = sphi 0, %s156
      %s176 = sphi 0, %s178
      %s179 = sphi 0, %s176
      %s180 = sphi 0, %s179
      %s196 = sphi 0, %s180
    $region4: #{tpu_custom_call.1} parent=1 // loop_header_branch
      %19 = sbr.rel (%p17) target = $region8
    $region5: #{tpu_custom_call.1} parent=1 // loop_body
      %s21 = ssub.s32 %s16, 1
      %s22 = ssub.s32 %s16, 2
      %s29 = sadd.s32 1, %s24
      %p30 = scmp.ge.s32.totalorder %s29, 2
      %s31 = scalar_select %p30, 0, %s29
      %s32 = sadd.s32 1, %s23
      %s33 = scalar_select %p30, %s32, %s23
      %p34 = scmp.ge.s32.totalorder %s33, 1
      %s35 = scalar_select %p34, 0, %s33
      %s36 = ssub.s32 %s24, %s31
      %s37 = ssub.s32 %s23, %s35
      %s38 = sor.u32 %s36, %s37
      %p39 = scmp.eq.s32.totalorder %s38, 0
      %s41 = sadd.s32 %s40, 1
      %s42 = scalar_select %p39, %s40, %s41
      %p45 = pneg %p39
      %p46 = scmp.eq.s32.totalorder %s16, 1
      %p47 = por %p45, %p46
      %p48 = scmp.ne.s32.totalorder %s40, %s43
      %p49 = scmp.eq.s32.totalorder %s16, 0
      %p50 = por %p48, %p49
      %p51 = scmp.ne.s32.totalorder %s40, %s43
      %p52 = scmp.eq.s32.totalorder %s21, 1
      %p53 = por %p51, %p52
      %p54 = scmp.ne.s32.totalorder %s43, %s44
      %p55 = scmp.eq.s32.totalorder %s21, 0
      %p56 = por %p54, %p55
      %p57 = scmp.ne.s32.totalorder %s43, %s44
      %p58 = scmp.eq.s32.totalorder %s22, 1
      %p59 = por %p57, %p58
      %p61 = scmp.ne.s32.totalorder %s44, %s60
      %p62 = scmp.eq.s32.totalorder %s22, 0
      %p63 = por %p61, %p62
      %s64 = ssub.s32 %s23, %s35
      %p65 = scmp.eq.s32.totalorder %s64, 0
      %s67 = sadd.s32 %s66, 1
      %s68 = scalar_select %p65, %s66, %s67
      %p71 = pneg %p65
      %p72 = scmp.eq.s32.totalorder %s16, 1
      %p73 = por %p71, %p72
      %p74 = scmp.ne.s32.totalorder %s66, %s69
      %p75 = scmp.eq.s32.totalorder %s16, 0
      %p76 = por %p74, %p75
      %p77 = scmp.ne.s32.totalorder %s66, %s69
      %p78 = scmp.eq.s32.totalorder %s21, 1
      %p79 = por %p77, %p78
      %p80 = scmp.ne.s32.totalorder %s69, %s70
      %p81 = scmp.eq.s32.totalorder %s21, 0
      %p82 = por %p80, %p81
      %p83 = scmp.ne.s32.totalorder %s69, %s70
      %p84 = scmp.eq.s32.totalorder %s22, 1
      %p85 = por %p83, %p84
      %p87 = scmp.ne.s32.totalorder %s70, %s86
      %p88 = scmp.eq.s32.totalorder %s22, 0
      %p89 = por %p87, %p88
      %s91 = sadd.s32 %s90, 1
      %p94 = scmp.eq.s32.totalorder %s16, 1
      %p95 = scmp.ne.s32.totalorder %s90, %s92
      %p96 = scmp.eq.s32.totalorder %s16, 0
      %p97 = por %p95, %p96
      %p98 = scmp.ne.s32.totalorder %s90, %s92
      %p99 = scmp.eq.s32.totalorder %s21, 1
      %p100 = por %p98, %p99
      %p101 = scmp.ne.s32.totalorder %s92, %s93
      %p102 = scmp.eq.s32.totalorder %s21, 0
      %p103 = por %p101, %p102
      %p104 = scmp.ne.s32.totalorder %s92, %s93
      %p105 = scmp.eq.s32.totalorder %s22, 1
      %p106 = por %p104, %p105
      %p108 = scmp.ne.s32.totalorder %s93, %s107
      %p109 = scmp.eq.s32.totalorder %s22, 0
      %p110 = por %p108, %p109
      %s112 = sadd.s32 %s111, 1
      %p115 = scmp.eq.s32.totalorder %s16, 1
      %p116 = scmp.ne.s32.totalorder %s111, %s113
      %p117 = scmp.eq.s32.totalorder %s16, 0
      %p118 = por %p116, %p117
      %p119 = scmp.ne.s32.totalorder %s111, %s113
      %p120 = scmp.eq.s32.totalorder %s21, 1
      %p121 = por %p119, %p120
      %p122 = scmp.ne.s32.totalorder %s113, %s114
      %p123 = scmp.eq.s32.totalorder %s21, 0
      %p124 = por %p122, %p123
      %p125 = scmp.ne.s32.totalorder %s113, %s114
      %p126 = scmp.eq.s32.totalorder %s22, 1
      %p127 = por %p125, %p126
      %p129 = scmp.ne.s32.totalorder %s114, %s128
      %p130 = scmp.eq.s32.totalorder %s22, 0
      %p131 = por %p129, %p130
      %s133 = sadd.s32 %s132, 1
      %p136 = scmp.eq.s32.totalorder %s16, 1
      %p137 = scmp.ne.s32.totalorder %s132, %s134
      %p138 = scmp.eq.s32.totalorder %s16, 0
      %p139 = por %p137, %p138
      %p140 = scmp.ne.s32.totalorder %s132, %s134
      %p141 = scmp.eq.s32.totalorder %s21, 1
      %p142 = por %p140, %p141
      %p143 = scmp.ne.s32.totalorder %s134, %s135
      %p144 = scmp.eq.s32.totalorder %s21, 0
      %p145 = por %p143, %p144
      %p146 = scmp.ne.s32.totalorder %s134, %s135
      %p147 = scmp.eq.s32.totalorder %s22, 1
      %p148 = por %p146, %p147
      %p150 = scmp.ne.s32.totalorder %s135, %s149
      %p151 = scmp.eq.s32.totalorder %s22, 0
      %p152 = por %p150, %p151
      %s154 = sadd.s32 %s153, 1
      %p157 = scmp.eq.s32.totalorder %s16, 1
      %p158 = scmp.ne.s32.totalorder %s153, %s155
      %p159 = scmp.eq.s32.totalorder %s16, 0
      %p160 = por %p158, %p159
      %p161 = scmp.ne.s32.totalorder %s153, %s155
      %p162 = scmp.eq.s32.totalorder %s21, 1
      %p163 = por %p161, %p162
      %p164 = scmp.ne.s32.totalorder %s155, %s156
      %p165 = scmp.eq.s32.totalorder %s21, 0
      %p166 = por %p164, %p165
      %p167 = scmp.ne.s32.totalorder %s155, %s156
      %p168 = scmp.eq.s32.totalorder %s22, 1
      %p169 = por %p167, %p168
      %p171 = scmp.ne.s32.totalorder %s156, %s170
      %p172 = scmp.eq.s32.totalorder %s22, 0
      %p173 = por %p171, %p172
      %s174 = ssub.s32 %s23, %s35
      %p175 = scmp.eq.s32.totalorder %s174, 0
      %s177 = sadd.s32 %s176, 1
      %s178 = scalar_select %p175, %s176, %s177
      %p181 = pneg %p175
      %p182 = scmp.eq.s32.totalorder %s16, 1
      %p183 = por %p181, %p182
      %p184 = scmp.ne.s32.totalorder %s176, %s179
      %p185 = scmp.eq.s32.totalorder %s16, 0
      %p186 = por %p184, %p185
      %p187 = scmp.ne.s32.totalorder %s176, %s179
      %p188 = scmp.eq.s32.totalorder %s21, 1
      %p189 = por %p187, %p188
      %p190 = scmp.ne.s32.totalorder %s179, %s180
      %p191 = scmp.eq.s32.totalorder %s21, 0
      %p192 = por %p190, %p191
      %p193 = scmp.ne.s32.totalorder %s179, %s180
      %p194 = scmp.eq.s32.totalorder %s22, 1
      %p195 = por %p193, %p194
      %p197 = scmp.ne.s32.totalorder %s180, %s196
      %p198 = scmp.eq.s32.totalorder %s22, 0
      %p199 = por %p197, %p198
      %p200 = scmp.le.s32.totalorder 1, %s16
      %p201 = scmp.lt.s32.totalorder %s16, 3
      %p202 = pnand %p200, %p201
      %p203 = pneg %p202
      // Predicated region
      $region9: #{tpu_custom_call.1} parent=5 // pred_check
        _
      $region10: #{tpu_custom_call.1} parent=5 // pred_check_branch
        %205 = sbr.rel (%p202) target = $region12
      $region11: #{tpu_custom_call.1} parent=5 // pred_region
        %s206 = ssub.s32 %s16, 1
        // Predicated region
        $region13: #{tpu_custom_call.1} parent=11 // pred_check
          %p207 = pneg %p82
        $region14: #{tpu_custom_call.1} parent=11 // pred_check_branch
          %209 = sbr.rel (%p207) target = $region16
        $region15: #{tpu_custom_call.1} parent=11 // pred_region
          %s210 = smul.u32 2, %s25
          %p211 = scmp.lt.s32.totalorder %s210, 1
          %s212 = scalar_select %p211, %s210, 1
          %s213 = smul.addr %s212, 8
          %s214 = scalar_lea.vmem %s1, %s213
          %s215 = smul.u32 2, %s25
        $region16: #{tpu_custom_call.1} parent=11 // pred_fallthru
          _
        // Predicated region
        $region17: #{tpu_custom_call.1} parent=11 // pred_check
          %p216 = pneg %p103
        $region18: #{tpu_custom_call.1} parent=11 // pred_check_branch
          %218 = sbr.rel (%p216) target = $region20
        $region19: #{tpu_custom_call.1} parent=11 // pred_region
          %220 = vsyncadd [#allocation7], 0
          %s221 = sshll.u32 %s2, 4
          %s222 = int_to_ptr.hbm [resolvable:$true] %s221
          %s223 = sshll.u32 [#allocation6], 4
          %s224 = int_to_ptr.vmem [resolvable:$true] %s223
          %229 = dma.hbm_to_vmem [thread:$0]  %s222, 4096, %s224, [#allocation7], 256, 256, 16
        $region20: #{tpu_custom_call.1} parent=11 // pred_fallthru
          _
        // Predicated region
        $region21: #{tpu_custom_call.1} parent=11 // pred_check
          %p230 = pneg %p124
        $region22: #{tpu_custom_call.1} parent=11 // pred_check_branch
          %232 = sbr.rel (%p230) target = $region24
        $region23: #{tpu_custom_call.1} parent=11 // pred_region
          %234 = vsyncadd [#allocation9], 0
          %s235 = sshll.u32 %s3, 4
          %s236 = int_to_ptr.hbm [resolvable:$true] %s235
          %s237 = sshll.u32 [#allocation8], 4
          %s238 = int_to_ptr.vmem [resolvable:$true] %s237
          %243 = dma.hbm_to_vmem [thread:$0]  %s236, 4096, %s238, [#allocation9], 256, 256, 16
        $region24: #{tpu_custom_call.1} parent=11 // pred_fallthru
          _
        // Predicated region
        $region25: #{tpu_custom_call.1} parent=11 // pred_check
          %p244 = pneg %p145
        $region26: #{tpu_custom_call.1} parent=11 // pred_check_branch
          %246 = sbr.rel (%p244) target = $region28
        $region27: #{tpu_custom_call.1} parent=11 // pred_region
          _
        $region28: #{tpu_custom_call.1} parent=11 // pred_fallthru
          _
        // Predicated region
        $region29: #{tpu_custom_call.1} parent=11 // pred_check
          %p247 = pneg %p166
        $region30: #{tpu_custom_call.1} parent=11 // pred_check_branch
          %249 = sbr.rel (%p247) target = $region32
        $region31: #{tpu_custom_call.1} parent=11 // pred_region
          _
        $region32: #{tpu_custom_call.1} parent=11 // pred_fallthru
          _
      $region12: #{tpu_custom_call.1} parent=5 // pred_fallthru
        _
      %p250 = scmp.lt.s32.totalorder %s16, 2
      // Predicated region
      $region33: #{tpu_custom_call.1} parent=5 // pred_check
        %p251 = pneg %p250
      $region34: #{tpu_custom_call.1} parent=5 // pred_check_branch
        %253 = sbr.rel (%p251) target = $region36
      $region35: #{tpu_custom_call.1} parent=5 // pred_region
        // Predicated region
        $region37: #{tpu_custom_call.1} parent=35 // pred_check
          %p254 = pneg %p50
        $region38: #{tpu_custom_call.1} parent=35 // pred_check_branch
          %256 = sbr.rel (%p254) target = $region40
        $region39: #{tpu_custom_call.1} parent=35 // pred_region
          %s257 = smul.u32 4, %s24
          %s258 = smul.u32 2, %s23
          %p259 = scmp.lt.s32.totalorder %s257, 7
          %s260 = scalar_select %p259, %s257, 7
          %p261 = scmp.lt.s32.totalorder %s258, 1
          %s262 = scalar_select %p261, %s258, 1
          %s263 = smul.addr %s260, 2
          %s264 = sadd.s32 %s262, %s263
          %s265 = smul.addr %s264, 8
          %s266 = scalar_lea.vmem %s0, %s265
          %s267 = smul.u32 4, %s24
          %s268 = smul.u32 2, %s23
        $region40: #{tpu_custom_call.1} parent=35 // pred_fallthru
          _
      $region36: #{tpu_custom_call.1} parent=5 // pred_fallthru
        _
      %p269 = scmp.le.s32.totalorder 1, %s16
      %p270 = scmp.lt.s32.totalorder %s16, 3
      %p271 = pnand %p269, %p270
      %p272 = pneg %p271
      // Predicated region
      $region41: #{tpu_custom_call.1} parent=5 // pred_check
        _
      $region42: #{tpu_custom_call.1} parent=5 // pred_check_branch
        %274 = sbr.rel (%p271) target = $region44
      $region43: #{tpu_custom_call.1} parent=5 // pred_region
        %s275 = ssub.s32 %s16, 1
        // Predicated region
        $region45: #{tpu_custom_call.1} parent=43 // pred_check
          %p276 = pneg %p103
        $region46: #{tpu_custom_call.1} parent=43 // pred_check_branch
          %278 = sbr.rel (%p276) target = $region48
        $region47: #{tpu_custom_call.1} parent=43 // pred_region
          %280 = dma.done [#allocation7], 4096
        $region48: #{tpu_custom_call.1} parent=43 // pred_fallthru
          _
        // Predicated region
        $region49: #{tpu_custom_call.1} parent=43 // pred_check
          %p281 = pneg %p124
        $region50: #{tpu_custom_call.1} parent=43 // pred_check_branch
          %283 = sbr.rel (%p281) target = $region52
        $region51: #{tpu_custom_call.1} parent=43 // pred_region
          %285 = dma.done [#allocation9], 4096
        $region52: #{tpu_custom_call.1} parent=43 // pred_fallthru
          _
        %s286 = smul.u32 4, %s26
        %s287 = smul.u32 2, %s25
        %p288 = scmp.lt.s32.totalorder %s286, 7
        %s289 = scalar_select %p288, %s286, 7
        %p290 = scmp.lt.s32.totalorder %s287, 1
        %s291 = scalar_select %p290, %s287, 1
        %s292 = smul.addr %s289, 2
        %s293 = sadd.s32 %s291, %s292
        %s294 = smul.addr %s293, 8
        %s295 = scalar_lea.vmem %s0, %s294
        %p296 = pneg %p56
        %p297 = pneg %p53
        %s298 = smul.u32 2, %s25
        %p299 = scmp.lt.s32.totalorder %s298, 1
        %s300 = scalar_select %p299, %s298, 1
        %s301 = smul.addr %s300, 8
        %s302 = scalar_lea.vmem %s1, %s301
        %p303 = pneg %p82
        %p304 = pneg %p79
        %p305 = pneg %p103
        %p306 = pneg %p100
        %p307 = pneg %p124
        %p308 = pneg %p121
        %p309 = pneg %p145
        %p310 = pneg %p142
        %p311 = pneg %p166
        %p312 = pneg %p163
        %p313 = pneg %p192
        %p314 = pneg %p189
        %s315 = smul.u32 2, %s25
        %p316 = scmp.lt.s32.totalorder %s315, 1
        %s317 = scalar_select %p316, %s315, 1
        %s318 = smul.addr %s317, 8
        %s319 = scalar_lea.vmem %s6, %s318
        %s320 = smul.u32 4, %s26
        %s321 = smul.u32 2, %s25
        %p322 = scmp.lt.s32.totalorder %s320, 7
        %s323 = scalar_select %p322, %s320, 7
        %p324 = scmp.lt.s32.totalorder %s321, 1
        %s325 = scalar_select %p324, %s321, 1
        %s326 = smul.addr %s323, 2
        %s327 = sadd.s32 %s325, %s326
        %s328 = smul.addr %s327, 8
        %s329 = scalar_lea.vmem %s0, %s328
        %s330 = smul.u32 4, %s26
        %s331 = smul.u32 2, %s25
        %s332 = smul.u32 2, %s25
        %p333 = scmp.lt.s32.totalorder %s332, 1
        %s334 = scalar_select %p333, %s332, 1
        %s335 = smul.addr %s334, 8
        %s336 = scalar_lea.vmem %s1, %s335
        %s337 = smul.u32 2, %s25
        %s338 = smul.u32 2, %s25
        %p339 = scmp.lt.s32.totalorder %s338, 1
        %s340 = scalar_select %p339, %s338, 1
        %s341 = smul.addr %s340, 8
        %s342 = scalar_lea.vmem %s6, %s341
        %s343 = smul.u32 2, %s25
        %p344 = scmp.eq.s32.totalorder %s26, 0
        // Predicated region
        $region53: #{tpu_custom_call.1} parent=43 // pred_check
          %p345 = pneg %p344
        $region54: #{tpu_custom_call.1} parent=43 // pred_check_branch
          %347 = sbr.rel (%p345) target = $region56
        $region55: #{tpu_custom_call.1} parent=43 // pred_region
          %348 = vst [vmem:[#allocation2] sm:$0xff] 0.0
          %349 = vst [vmem:[#allocation2 + $0x8] sm:$0xff] 0.0
          %350 = vst [vmem:[#allocation3] sm:$0xff] 0.0
          %351 = vst [vmem:[#allocation3 + $0x8] sm:$0xff] 0.0
        $region56: #{tpu_custom_call.1} parent=43 // pred_fallthru
          _
        %v352 = vld [vmem:[%s329] sm:$0xff]
        %v353 = vld [vmem:[%s329 + $0x8] sm:$0xff]
        %v354 = vld [vmem:[%s329 + $0x10] sm:$0xff]
        %v355 = vld [vmem:[%s329 + $0x18] sm:$0xff]
        %v356 = vld [vmem:[%s329 + $0x20] sm:$0xff]
        %v357 = vld [vmem:[%s329 + $0x28] sm:$0xff]
        %v358 = vld [vmem:[%s329 + $0x30] sm:$0xff]
        %v359 = vld [vmem:[%s329 + $0x38] sm:$0xff]
        %v360 = vlaneseq
        %v361 = vand.u32 %v360, 127
        %362 = vset.pattern.permute.xlu0 0
        %363 = vperm.xlu0 %362, %v352
        %v364 = vpop.permute.xlu0 %363
        %365 = vset.pattern.permute.xlu0 0
        %366 = vperm.xlu0 %365, %v353
        %v367 = vpop.permute.xlu0 %366
        %368 = vset.pattern.permute.xlu0 0
        %369 = vperm.xlu0 %368, %v354
        %v370 = vpop.permute.xlu0 %369
        %371 = vset.pattern.permute.xlu0 0
        %372 = vperm.xlu0 %371, %v355
        %v373 = vpop.permute.xlu0 %372
        %374 = vset.pattern.permute.xlu0 0
        %375 = vperm.xlu0 %374, %v356
        %v376 = vpop.permute.xlu0 %375
        %377 = vset.pattern.permute.xlu0 0
        %378 = vperm.xlu0 %377, %v357
        %v379 = vpop.permute.xlu0 %378
        %380 = vset.pattern.permute.xlu0 0
        %381 = vperm.xlu0 %380, %v358
        %v382 = vpop.permute.xlu0 %381
        %383 = vset.pattern.permute.xlu0 0
        %384 = vperm.xlu0 %383, %v359
        %v385 = vpop.permute.xlu0 %384
        %vm386 = vcmp.eq.s32.totalorder %v364, %v361
        %vm387 = vcmp.eq.s32.totalorder %v367, %v361
        %vm388 = vcmp.eq.s32.totalorder %v370, %v361
        %vm389 = vcmp.eq.s32.totalorder %v373, %v361
        %vm390 = vcmp.eq.s32.totalorder %v376, %v361
        %vm391 = vcmp.eq.s32.totalorder %v379, %v361
        %vm392 = vcmp.eq.s32.totalorder %v382, %v361
        %vm393 = vcmp.eq.s32.totalorder %v385, %v361
        %v394 = vsel %vm386, 1.0, 0.0
        %v395 = vsel %vm387, 1.0, 0.0
        %v396 = vsel %vm388, 1.0, 0.0
        %v397 = vsel %vm389, 1.0, 0.0
        %v398 = vsel %vm390, 1.0, 0.0
        %v399 = vsel %vm391, 1.0, 0.0
        %v400 = vsel %vm392, 1.0, 0.0
        %v401 = vsel %vm393, 1.0, 0.0
        %v402 = vpack.c.bf16 %v394, %v394
        %v403 = vpack.c.bf16 %v395, %v395
        %v404 = vpack.c.bf16 %v396, %v396
        %v405 = vpack.c.bf16 %v397, %v397
        %v406 = vpack.c.bf16 %v398, %v398
        %v407 = vpack.c.bf16 %v399, %v399
        %v408 = vpack.c.bf16 %v400, %v400
        %v409 = vpack.c.bf16 %v401, %v401
        %v410 = vld [vmem:[#allocation6] sm:$0xff]
        %v411 = vld [vmem:[#allocation6 + $0x8] sm:$0xff]
        %v412 = vld [vmem:[#allocation6 + $0x10] sm:$0xff]
        %v413 = vld [vmem:[#allocation6 + $0x18] sm:$0xff]
        %v414 = vld [vmem:[#allocation6 + $0x20] sm:$0xff]
        %v415 = vld [vmem:[#allocation6 + $0x28] sm:$0xff]
        %v416 = vld [vmem:[#allocation6 + $0x30] sm:$0xff]
        %v417 = vld [vmem:[#allocation6 + $0x38] sm:$0xff]
        %v418 = vld [vmem:[#allocation6 + $0x40] sm:$0xff]
        %v419 = vld [vmem:[#allocation6 + $0x48] sm:$0xff]
        %v420 = vld [vmem:[#allocation6 + $0x50] sm:$0xff]
        %v421 = vld [vmem:[#allocation6 + $0x58] sm:$0xff]
        %v422 = vld [vmem:[#allocation6 + $0x60] sm:$0xff]
        %v423 = vld [vmem:[#allocation6 + $0x68] sm:$0xff]
        %v424 = vld [vmem:[#allocation6 + $0x70] sm:$0xff]
        %v425 = vld [vmem:[#allocation6 + $0x78] sm:$0xff]
        %v426 = vld [vmem:[#allocation6 + $0x80] sm:$0xff]
        %v427 = vld [vmem:[#allocation6 + $0x88] sm:$0xff]
        %v428 = vld [vmem:[#allocation6 + $0x90] sm:$0xff]
        %v429 = vld [vmem:[#allocation6 + $0x98] sm:$0xff]
        %v430 = vld [vmem:[#allocation6 + $0xa0] sm:$0xff]
        %v431 = vld [vmem:[#allocation6 + $0xa8] sm:$0xff]
        %v432 = vld [vmem:[#allocation6 + $0xb0] sm:$0xff]
        %v433 = vld [vmem:[#allocation6 + $0xb8] sm:$0xff]
        %v434 = vld [vmem:[#allocation6 + $0xc0] sm:$0xff]
        %v435 = vld [vmem:[#allocation6 + $0xc8] sm:$0xff]
        %v436 = vld [vmem:[#allocation6 + $0xd0] sm:$0xff]
        %v437 = vld [vmem:[#allocation6 + $0xd8] sm:$0xff]
        %v438 = vld [vmem:[#allocation6 + $0xe0] sm:$0xff]
        %v439 = vld [vmem:[#allocation6 + $0xe8] sm:$0xff]
        %v440 = vld [vmem:[#allocation6 + $0xf0] sm:$0xff]
        %v441 = vld [vmem:[#allocation6 + $0xf8] sm:$0xff]
        %v450 = vunpack.c.l.b16 %v402
        %v451 = vunpack.c.l.b16 %v403
        %v452 = vunpack.c.l.b16 %v404
        %v453 = vunpack.c.l.b16 %v405
        %v454 = vunpack.c.l.b16 %v406
        %v455 = vunpack.c.l.b16 %v407
        %v456 = vunpack.c.l.b16 %v408
        %v457 = vunpack.c.l.b16 %v409
        %v458 = vpack.c.b16 %v451, %v450
        %v459 = vpack.c.b16 %v453, %v452
        %v460 = vpack.c.b16 %v455, %v454
        %v461 = vpack.c.b16 %v457, %v456
        %v498 = vunpack.c.l.b16 %v410
        %v499 = vunpack.c.h.b16 %v410
        %v500 = vunpack.c.l.b16 %v411
        %v501 = vunpack.c.h.b16 %v411
        %v502 = vunpack.c.l.b16 %v412
        %v503 = vunpack.c.h.b16 %v412
        %v504 = vunpack.c.l.b16 %v413
        %v505 = vunpack.c.h.b16 %v413
        %v506 = vunpack.c.l.b16 %v414
        %v507 = vunpack.c.h.b16 %v414
        %v508 = vunpack.c.l.b16 %v415
        %v509 = vunpack.c.h.b16 %v415
        %v510 = vunpack.c.l.b16 %v416
        %v511 = vunpack.c.h.b16 %v416
        %v512 = vunpack.c.l.b16 %v417
        %v513 = vunpack.c.h.b16 %v417
        %v514 = vunpack.c.l.b16 %v418
        %v515 = vunpack.c.h.b16 %v418
        %v516 = vunpack.c.l.b16 %v419
        %v517 = vunpack.c.h.b16 %v419
        %v518 = vunpack.c.l.b16 %v420
        %v519 = vunpack.c.h.b16 %v420
        %v520 = vunpack.c.l.b16 %v421
        %v521 = vunpack.c.h.b16 %v421
        %v522 = vunpack.c.l.b16 %v422
        %v523 = vunpack.c.h.b16 %v422
        %v524 = vunpack.c.l.b16 %v423
        %v525 = vunpack.c.h.b16 %v423
        %v526 = vunpack.c.l.b16 %v424
        %v527 = vunpack.c.h.b16 %v424
        %v528 = vunpack.c.l.b16 %v425
        %v529 = vunpack.c.h.b16 %v425
        %v530 = vunpack.c.l.b16 %v426
        %v531 = vunpack.c.h.b16 %v426
        %v532 = vunpack.c.l.b16 %v427
        %v533 = vunpack.c.h.b16 %v427
        %v534 = vunpack.c.l.b16 %v428
        %v535 = vunpack.c.h.b16 %v428
        %v536 = vunpack.c.l.b16 %v429
        %v537 = vunpack.c.h.b16 %v429
        %v538 = vunpack.c.l.b16 %v430
        %v539 = vunpack.c.h.b16 %v430
        %v540 = vunpack.c.l.b16 %v431
        %v541 = vunpack.c.h.b16 %v431
        %v542 = vunpack.c.l.b16 %v432
        %v543 = vunpack.c.h.b16 %v432
        %v544 = vunpack.c.l.b16 %v433
        %v545 = vunpack.c.h.b16 %v433
        %v546 = vunpack.c.l.b16 %v434
        %v547 = vunpack.c.h.b16 %v434
        %v548 = vunpack.c.l.b16 %v435
        %v549 = vunpack.c.h.b16 %v435
        %v550 = vunpack.c.l.b16 %v436
        %v551 = vunpack.c.h.b16 %v436
        %v552 = vunpack.c.l.b16 %v437
        %v553 = vunpack.c.h.b16 %v437
        %v554 = vunpack.c.l.b16 %v438
        %v555 = vunpack.c.h.b16 %v438
        %v556 = vunpack.c.l.b16 %v439
        %v557 = vunpack.c.h.b16 %v439
        %v558 = vunpack.c.l.b16 %v440
        %v559 = vunpack.c.h.b16 %v440
        %v560 = vunpack.c.l.b16 %v441
        %v561 = vunpack.c.h.b16 %v441
        %v562 = vpack.c.b16 %v502, %v498
        %v563 = vpack.c.b16 %v503, %v499
        %v564 = vpack.c.b16 %v504, %v500
        %v565 = vpack.c.b16 %v505, %v501
        %v566 = vpack.c.b16 %v510, %v506
        %v567 = vpack.c.b16 %v511, %v507
        %v568 = vpack.c.b16 %v512, %v508
        %v569 = vpack.c.b16 %v513, %v509
        %v570 = vpack.c.b16 %v518, %v514
        %v571 = vpack.c.b16 %v519, %v515
        %v572 = vpack.c.b16 %v520, %v516
        %v573 = vpack.c.b16 %v521, %v517
        %v574 = vpack.c.b16 %v526, %v522
        %v575 = vpack.c.b16 %v527, %v523
        %v576 = vpack.c.b16 %v528, %v524
        %v577 = vpack.c.b16 %v529, %v525
        %v578 = vpack.c.b16 %v534, %v530
        %v579 = vpack.c.b16 %v535, %v531
        %v580 = vpack.c.b16 %v536, %v532
        %v581 = vpack.c.b16 %v537, %v533
        %v582 = vpack.c.b16 %v542, %v538
        %v583 = vpack.c.b16 %v543, %v539
        %v584 = vpack.c.b16 %v544, %v540
        %v585 = vpack.c.b16 %v545, %v541
        %v586 = vpack.c.b16 %v550, %v546
        %v587 = vpack.c.b16 %v551, %v547
        %v588 = vpack.c.b16 %v552, %v548
        %v589 = vpack.c.b16 %v553, %v549
        %v590 = vpack.c.b16 %v558, %v554
        %v591 = vpack.c.b16 %v559, %v555
        %v592 = vpack.c.b16 %v560, %v556
        %v593 = vpack.c.b16 %v561, %v557
        %626 = vmatpush.bf16.msra.mxu0 %v590
        %627 = vmatpush.bf16.msra.mxu0 %v586
        %628 = vmatpush.bf16.msra.mxu0 %v582
        %629 = vmatpush.bf16.msra.mxu0 %v578
        %630 = vmatpush.bf16.msra.mxu0 %v574
        %631 = vmatpush.bf16.msra.mxu0 %v570
        %632 = vmatpush.bf16.msra.mxu0 %v566
        %633 = vmatpush.bf16.msra.mxu0 %v562
        %634 = vmatmul.bf16.gmra.mxu0 %v458
        %v635 = vpop.f32.mrf.mxu0
        %v636 = vadd.f32 0.0, %v635
        %v637 = vpop.f32.mrf.mxu0
        %v638 = vadd.f32 0.0, %v637
        %639 = vmatmul.bf16.gmra.mxu0 %v459
        %v640 = vpop.f32.mrf.mxu0
        %v641 = vadd.f32 0.0, %v640
        %v642 = vpop.f32.mrf.mxu0
        %v643 = vadd.f32 0.0, %v642
        %644 = vmatmul.bf16.gmra.mxu0 %v460
        %v645 = vpop.f32.mrf.mxu0
        %v646 = vadd.f32 0.0, %v645
        %v647 = vpop.f32.mrf.mxu0
        %v648 = vadd.f32 0.0, %v647
        %649 = vmatmul.bf16.gmra.mxu0 %v461
        %v650 = vpop.f32.mrf.mxu0
        %v651 = vadd.f32 0.0, %v650
        %v652 = vpop.f32.mrf.mxu0
        %v653 = vadd.f32 0.0, %v652
        %654 = vdwg.mxu0
        %655 = vmatpush.bf16.msra.mxu0 %v591
        %656 = vmatpush.bf16.msra.mxu0 %v587
        %657 = vmatpush.bf16.msra.mxu0 %v583
        %658 = vmatpush.bf16.msra.mxu0 %v579
        %659 = vmatpush.bf16.msra.mxu0 %v575
        %660 = vmatpush.bf16.msra.mxu0 %v571
        %661 = vmatpush.bf16.msra.mxu0 %v567
        %662 = vmatpush.bf16.msra.mxu0 %v563
        %663 = vmatmul.bf16.gmra.mxu0 %v458
        %v664 = vpop.f32.mrf.mxu0
        %v665 = vadd.f32 0.0, %v664
        %v666 = vpop.f32.mrf.mxu0
        %v667 = vadd.f32 0.0, %v666
        %668 = vmatmul.bf16.gmra.mxu0 %v459
        %v669 = vpop.f32.mrf.mxu0
        %v670 = vadd.f32 0.0, %v669
        %v671 = vpop.f32.mrf.mxu0
        %v672 = vadd.f32 0.0, %v671
        %673 = vmatmul.bf16.gmra.mxu0 %v460
        %v674 = vpop.f32.mrf.mxu0
        %v675 = vadd.f32 0.0, %v674
        %v676 = vpop.f32.mrf.mxu0
        %v677 = vadd.f32 0.0, %v676
        %678 = vmatmul.bf16.gmra.mxu0 %v461
        %v679 = vpop.f32.mrf.mxu0
        %v680 = vadd.f32 0.0, %v679
        %v681 = vpop.f32.mrf.mxu0
        %v682 = vadd.f32 0.0, %v681
        %683 = vdwg.mxu0
        %684 = vmatpush.bf16.msra.mxu0 %v592
        %685 = vmatpush.bf16.msra.mxu0 %v588
        %686 = vmatpush.bf16.msra.mxu0 %v584
        %687 = vmatpush.bf16.msra.mxu0 %v580
        %688 = vmatpush.bf16.msra.mxu0 %v576
        %689 = vmatpush.bf16.msra.mxu0 %v572
        %690 = vmatpush.bf16.msra.mxu0 %v568
        %691 = vmatpush.bf16.msra.mxu0 %v564
        %692 = vmatmul.bf16.gmra.mxu0 %v458
        %v693 = vpop.f32.mrf.mxu0
        %v694 = vadd.f32 0.0, %v693
        %v695 = vpop.f32.mrf.mxu0
        %v696 = vadd.f32 0.0, %v695
        %697 = vmatmul.bf16.gmra.mxu0 %v459
        %v698 = vpop.f32.mrf.mxu0
        %v699 = vadd.f32 0.0, %v698
        %v700 = vpop.f32.mrf.mxu0
        %v701 = vadd.f32 0.0, %v700
        %702 = vmatmul.bf16.gmra.mxu0 %v460
        %v703 = vpop.f32.mrf.mxu0
        %v704 = vadd.f32 0.0, %v703
        %v705 = vpop.f32.mrf.mxu0
        %v706 = vadd.f32 0.0, %v705
        %707 = vmatmul.bf16.gmra.mxu0 %v461
        %v708 = vpop.f32.mrf.mxu0
        %v709 = vadd.f32 0.0, %v708
        %v710 = vpop.f32.mrf.mxu0
        %v711 = vadd.f32 0.0, %v710
        %712 = vdwg.mxu0
        %713 = vmatpush.bf16.msra.mxu0 %v593
        %714 = vmatpush.bf16.msra.mxu0 %v589
        %715 = vmatpush.bf16.msra.mxu0 %v585
        %716 = vmatpush.bf16.msra.mxu0 %v581
        %717 = vmatpush.bf16.msra.mxu0 %v577
        %718 = vmatpush.bf16.msra.mxu0 %v573
        %719 = vmatpush.bf16.msra.mxu0 %v569
        %720 = vmatpush.bf16.msra.mxu0 %v565
        %721 = vmatmul.bf16.gmra.mxu0 %v458
        %v722 = vpop.f32.mrf.mxu0
        %v723 = vadd.f32 0.0, %v722
        %v724 = vpop.f32.mrf.mxu0
        %v725 = vadd.f32 0.0, %v724
        %726 = vmatmul.bf16.gmra.mxu0 %v459
        %v727 = vpop.f32.mrf.mxu0
        %v728 = vadd.f32 0.0, %v727
        %v729 = vpop.f32.mrf.mxu0
        %v730 = vadd.f32 0.0, %v729
        %731 = vmatmul.bf16.gmra.mxu0 %v460
        %v732 = vpop.f32.mrf.mxu0
        %v733 = vadd.f32 0.0, %v732
        %v734 = vpop.f32.mrf.mxu0
        %v735 = vadd.f32 0.0, %v734
        %736 = vmatmul.bf16.gmra.mxu0 %v461
        %v737 = vpop.f32.mrf.mxu0
        %v738 = vadd.f32 0.0, %v737
        %v739 = vpop.f32.mrf.mxu0
        %v740 = vadd.f32 0.0, %v739
        %741 = vdwg.mxu0
        %742 = vst [vmem:[#allocation4] sm:$0xff] %v636
        %743 = vst [vmem:[#allocation4 + $0x8] sm:$0xff] %v665
        %744 = vst [vmem:[#allocation4 + $0x10] sm:$0xff] %v694
        %745 = vst [vmem:[#allocation4 + $0x18] sm:$0xff] %v723
        %746 = vst [vmem:[#allocation4 + $0x20] sm:$0xff] %v638
        %747 = vst [vmem:[#allocation4 + $0x28] sm:$0xff] %v667
        %748 = vst [vmem:[#allocation4 + $0x30] sm:$0xff] %v696
        %749 = vst [vmem:[#allocation4 + $0x38] sm:$0xff] %v725
        %750 = vst [vmem:[#allocation4 + $0x40] sm:$0xff] %v641
        %751 = vst [vmem:[#allocation4 + $0x48] sm:$0xff] %v670
        %752 = vst [vmem:[#allocation4 + $0x50] sm:$0xff] %v699
        %753 = vst [vmem:[#allocation4 + $0x58] sm:$0xff] %v728
        %754 = vst [vmem:[#allocation4 + $0x60] sm:$0xff] %v643
        %755 = vst [vmem:[#allocation4 + $0x68] sm:$0xff] %v672
        %756 = vst [vmem:[#allocation4 + $0x70] sm:$0xff] %v701
        %757 = vst [vmem:[#allocation4 + $0x78] sm:$0xff] %v730
        %758 = vst [vmem:[#allocation4 + $0x80] sm:$0xff] %v646
        %759 = vst [vmem:[#allocation4 + $0x88] sm:$0xff] %v675
        %760 = vst [vmem:[#allocation4 + $0x90] sm:$0xff] %v704
        %761 = vst [vmem:[#allocation4 + $0x98] sm:$0xff] %v733
        %762 = vst [vmem:[#allocation4 + $0xa0] sm:$0xff] %v648
        %763 = vst [vmem:[#allocation4 + $0xa8] sm:$0xff] %v677
        %764 = vst [vmem:[#allocation4 + $0xb0] sm:$0xff] %v706
        %765 = vst [vmem:[#allocation4 + $0xb8] sm:$0xff] %v735
        %766 = vst [vmem:[#allocation4 + $0xc0] sm:$0xff] %v651
        %767 = vst [vmem:[#allocation4 + $0xc8] sm:$0xff] %v680
        %768 = vst [vmem:[#allocation4 + $0xd0] sm:$0xff] %v709
        %769 = vst [vmem:[#allocation4 + $0xd8] sm:$0xff] %v738
        %770 = vst [vmem:[#allocation4 + $0xe0] sm:$0xff] %v653
        %771 = vst [vmem:[#allocation4 + $0xe8] sm:$0xff] %v682
        %772 = vst [vmem:[#allocation4 + $0xf0] sm:$0xff] %v711
        %773 = vst [vmem:[#allocation4 + $0xf8] sm:$0xff] %v740
        %v774 = vld [vmem:[%s336] sm:$0xff]
        %v775 = vld [vmem:[%s336 + $0x8] sm:$0xff]
        %s776 = smul.u32 %s26, 4
        %v777 = vld [vmem:[#allocation2] sm:$0xff]
        %v778 = vld [vmem:[#allocation2 + $0x8] sm:$0xff]
        %v779 = vld [vmem:[#allocation3] sm:$0xff]
        %v780 = vld [vmem:[#allocation3 + $0x8] sm:$0xff]
        %v781 = vld [vmem:[#allocation4] sm:$0xff]
        %v782 = vld [vmem:[#allocation4 + $0x8] sm:$0xff]
        %v783 = vld [vmem:[#allocation4 + $0x10] sm:$0xff]
        %v784 = vld [vmem:[#allocation4 + $0x18] sm:$0xff]
        %v785 = vld [vmem:[#allocation4 + $0x20] sm:$0xff]
        %v786 = vld [vmem:[#allocation4 + $0x28] sm:$0xff]
        %v787 = vld [vmem:[#allocation4 + $0x30] sm:$0xff]
        %v788 = vld [vmem:[#allocation4 + $0x38] sm:$0xff]
        %v789 = vpack.c.bf16 %v778, %v777
        %v790 = vld [vmem:[#allocation8] sm:$0xff]
        %v791 = vld [vmem:[#allocation8 + $0x8] sm:$0xff]
        %v792 = vld [vmem:[#allocation8 + $0x10] sm:$0xff]
        %v793 = vld [vmem:[#allocation8 + $0x18] sm:$0xff]
        %v794 = vld [vmem:[#allocation8 + $0x20] sm:$0xff]
        %v795 = vld [vmem:[#allocation8 + $0x28] sm:$0xff]
        %v796 = vld [vmem:[#allocation8 + $0x30] sm:$0xff]
        %v797 = vld [vmem:[#allocation8 + $0x38] sm:$0xff]
        %v798 = vld [vmem:[#allocation8 + $0x40] sm:$0xff]
        %v799 = vld [vmem:[#allocation8 + $0x48] sm:$0xff]
        %v800 = vld [vmem:[#allocation8 + $0x50] sm:$0xff]
        %v801 = vld [vmem:[#allocation8 + $0x58] sm:$0xff]
        %v802 = vld [vmem:[#allocation8 + $0x60] sm:$0xff]
        %v803 = vld [vmem:[#allocation8 + $0x68] sm:$0xff]
        %v804 = vld [vmem:[#allocation8 + $0x70] sm:$0xff]
        %v805 = vld [vmem:[#allocation8 + $0x78] sm:$0xff]
        %v806 = vld [vmem:[#allocation8 + $0x80] sm:$0xff]
        %v807 = vld [vmem:[#allocation8 + $0x88] sm:$0xff]
        %v808 = vld [vmem:[#allocation8 + $0x90] sm:$0xff]
        %v809 = vld [vmem:[#allocation8 + $0x98] sm:$0xff]
        %v810 = vld [vmem:[#allocation8 + $0xa0] sm:$0xff]
        %v811 = vld [vmem:[#allocation8 + $0xa8] sm:$0xff]
        %v812 = vld [vmem:[#allocation8 + $0xb0] sm:$0xff]
        %v813 = vld [vmem:[#allocation8 + $0xb8] sm:$0xff]
        %v814 = vld [vmem:[#allocation8 + $0xc0] sm:$0xff]
        %v815 = vld [vmem:[#allocation8 + $0xc8] sm:$0xff]
        %v816 = vld [vmem:[#allocation8 + $0xd0] sm:$0xff]
        %v817 = vld [vmem:[#allocation8 + $0xd8] sm:$0xff]
        %v818 = vld [vmem:[#allocation8 + $0xe0] sm:$0xff]
        %v819 = vld [vmem:[#allocation8 + $0xe8] sm:$0xff]
        %v820 = vld [vmem:[#allocation8 + $0xf0] sm:$0xff]
        %v821 = vld [vmem:[#allocation8 + $0xf8] sm:$0xff]
        %v854 = vunpack.c.l.b16 %v790
        %v855 = vunpack.c.h.b16 %v790
        %v856 = vunpack.c.l.b16 %v791
        %v857 = vunpack.c.h.b16 %v791
        %v858 = vunpack.c.l.b16 %v792
        %v859 = vunpack.c.h.b16 %v792
        %v860 = vunpack.c.l.b16 %v793
        %v861 = vunpack.c.h.b16 %v793
        %v862 = vunpack.c.l.b16 %v794
        %v863 = vunpack.c.h.b16 %v794
        %v864 = vunpack.c.l.b16 %v795
        %v865 = vunpack.c.h.b16 %v795
        %v866 = vunpack.c.l.b16 %v796
        %v867 = vunpack.c.h.b16 %v796
        %v868 = vunpack.c.l.b16 %v797
        %v869 = vunpack.c.h.b16 %v797
        %v870 = vunpack.c.l.b16 %v798
        %v871 = vunpack.c.h.b16 %v798
        %v872 = vunpack.c.l.b16 %v799
        %v873 = vunpack.c.h.b16 %v799
        %v874 = vunpack.c.l.b16 %v800
        %v875 = vunpack.c.h.b16 %v800
        %v876 = vunpack.c.l.b16 %v801
        %v877 = vunpack.c.h.b16 %v801
        %v878 = vunpack.c.l.b16 %v802
        %v879 = vunpack.c.h.b16 %v802
        %v880 = vunpack.c.l.b16 %v803
        %v881 = vunpack.c.h.b16 %v803
        %v882 = vunpack.c.l.b16 %v804
        %v883 = vunpack.c.h.b16 %v804
        %v884 = vunpack.c.l.b16 %v805
        %v885 = vunpack.c.h.b16 %v805
        %v886 = vunpack.c.l.b16 %v806
        %v887 = vunpack.c.h.b16 %v806
        %v888 = vunpack.c.l.b16 %v807
        %v889 = vunpack.c.h.b16 %v807
        %v890 = vunpack.c.l.b16 %v808
        %v891 = vunpack.c.h.b16 %v808
        %v892 = vunpack.c.l.b16 %v809
        %v893 = vunpack.c.h.b16 %v809
        %v894 = vunpack.c.l.b16 %v810
        %v895 = vunpack.c.h.b16 %v810
        %v896 = vunpack.c.l.b16 %v811
        %v897 = vunpack.c.h.b16 %v811
        %v898 = vunpack.c.l.b16 %v812
        %v899 = vunpack.c.h.b16 %v812
        %v900 = vunpack.c.l.b16 %v813
        %v901 = vunpack.c.h.b16 %v813
        %v902 = vunpack.c.l.b16 %v814
        %v903 = vunpack.c.h.b16 %v814
        %v904 = vunpack.c.l.b16 %v815
        %v905 = vunpack.c.h.b16 %v815
        %v906 = vunpack.c.l.b16 %v816
        %v907 = vunpack.c.h.b16 %v816
        %v908 = vunpack.c.l.b16 %v817
        %v909 = vunpack.c.h.b16 %v817
        %v910 = vunpack.c.l.b16 %v818
        %v911 = vunpack.c.h.b16 %v818
        %v912 = vunpack.c.l.b16 %v819
        %v913 = vunpack.c.h.b16 %v819
        %v914 = vunpack.c.l.b16 %v820
        %v915 = vunpack.c.h.b16 %v820
        %v916 = vunpack.c.l.b16 %v821
        %v917 = vunpack.c.h.b16 %v821
        %v918 = vpack.c.b16 %v858, %v854
        %v919 = vpack.c.b16 %v859, %v855
        %v920 = vpack.c.b16 %v860, %v856
        %v921 = vpack.c.b16 %v861, %v857
        %v922 = vpack.c.b16 %v866, %v862
        %v923 = vpack.c.b16 %v867, %v863
        %v924 = vpack.c.b16 %v868, %v864
        %v925 = vpack.c.b16 %v869, %v865
        %v926 = vpack.c.b16 %v874, %v870
        %v927 = vpack.c.b16 %v875, %v871
        %v928 = vpack.c.b16 %v876, %v872
        %v929 = vpack.c.b16 %v877, %v873
        %v930 = vpack.c.b16 %v882, %v878
        %v931 = vpack.c.b16 %v883, %v879
        %v932 = vpack.c.b16 %v884, %v880
        %v933 = vpack.c.b16 %v885, %v881
        %v934 = vpack.c.b16 %v890, %v886
        %v935 = vpack.c.b16 %v891, %v887
        %v936 = vpack.c.b16 %v892, %v888
        %v937 = vpack.c.b16 %v893, %v889
        %v938 = vpack.c.b16 %v898, %v894
        %v939 = vpack.c.b16 %v899, %v895
        %v940 = vpack.c.b16 %v900, %v896
        %v941 = vpack.c.b16 %v901, %v897
        %v942 = vpack.c.b16 %v906, %v902
        %v943 = vpack.c.b16 %v907, %v903
        %v944 = vpack.c.b16 %v908, %v904
        %v945 = vpack.c.b16 %v909, %v905
        %v946 = vpack.c.b16 %v914, %v910
        %v947 = vpack.c.b16 %v915, %v911
        %v948 = vpack.c.b16 %v916, %v912
        %v949 = vpack.c.b16 %v917, %v913
        %982 = vmatpush.bf16.msra.mxu0 %v946
        %983 = vmatpush.bf16.msra.mxu0 %v942
        %984 = vmatpush.bf16.msra.mxu0 %v938
        %985 = vmatpush.bf16.msra.mxu0 %v934
        %986 = vmatpush.bf16.msra.mxu0 %v930
        %987 = vmatpush.bf16.msra.mxu0 %v926
        %988 = vmatpush.bf16.msra.mxu0 %v922
        %989 = vmatpush.bf16.msra.mxu0 %v918
        %990 = vmatmul.bf16.gmra.mxu0 %v789
        %v991 = vpop.f32.mrf.mxu0
        %v992 = vadd.f32 0.0, %v991
        %v993 = vpop.f32.mrf.mxu0
        %v994 = vadd.f32 0.0, %v993
        %995 = vdwg.mxu0
        %996 = vmatpush.bf16.msra.mxu0 %v947
        %997 = vmatpush.bf16.msra.mxu0 %v943
        %998 = vmatpush.bf16.msra.mxu0 %v939
        %999 = vmatpush.bf16.msra.mxu0 %v935
        %1000 = vmatpush.bf16.msra.mxu0 %v931
        %1001 = vmatpush.bf16.msra.mxu0 %v927
        %1002 = vmatpush.bf16.msra.mxu0 %v923
        %1003 = vmatpush.bf16.msra.mxu0 %v919
        %1004 = vmatmul.bf16.gmra.mxu0 %v789
        %v1005 = vpop.f32.mrf.mxu0
        %v1006 = vadd.f32 0.0, %v1005
        %v1007 = vpop.f32.mrf.mxu0
        %v1008 = vadd.f32 0.0, %v1007
        %1009 = vdwg.mxu0
        %1010 = vmatpush.bf16.msra.mxu0 %v948
        %1011 = vmatpush.bf16.msra.mxu0 %v944
        %1012 = vmatpush.bf16.msra.mxu0 %v940
        %1013 = vmatpush.bf16.msra.mxu0 %v936
        %1014 = vmatpush.bf16.msra.mxu0 %v932
        %1015 = vmatpush.bf16.msra.mxu0 %v928
        %1016 = vmatpush.bf16.msra.mxu0 %v924
        %1017 = vmatpush.bf16.msra.mxu0 %v920
        %1018 = vmatmul.bf16.gmra.mxu0 %v789
        %v1019 = vpop.f32.mrf.mxu0
        %v1020 = vadd.f32 0.0, %v1019
        %v1021 = vpop.f32.mrf.mxu0
        %v1022 = vadd.f32 0.0, %v1021
        %1023 = vdwg.mxu0
        %1024 = vmatpush.bf16.msra.mxu0 %v949
        %1025 = vmatpush.bf16.msra.mxu0 %v945
        %1026 = vmatpush.bf16.msra.mxu0 %v941
        %1027 = vmatpush.bf16.msra.mxu0 %v937
        %1028 = vmatpush.bf16.msra.mxu0 %v933
        %1029 = vmatpush.bf16.msra.mxu0 %v929
        %1030 = vmatpush.bf16.msra.mxu0 %v925
        %1031 = vmatpush.bf16.msra.mxu0 %v921
        %1032 = vmatmul.bf16.gmra.mxu0 %v789
        %v1033 = vpop.f32.mrf.mxu0
        %v1034 = vadd.f32 0.0, %v1033
        %v1035 = vpop.f32.mrf.mxu0
        %v1036 = vadd.f32 0.0, %v1035
        %1037 = vdwg.mxu0
        %v1038 = vadd.f32 %v781, %v992
        %v1039 = vadd.f32 %v782, %v1006
        %v1040 = vadd.f32 %v783, %v1020
        %v1041 = vadd.f32 %v784, %v1034
        %v1042 = vadd.f32 %v785, %v994
        %v1043 = vadd.f32 %v786, %v1008
        %v1044 = vadd.f32 %v787, %v1022
        %v1045 = vadd.f32 %v788, %v1036
        %v1046 = vxor.u32 %v1038, 2147483648
        %v1047 = vxor.u32 %v1042, 2147483648
        %v1048 = vmul.f32 %v1046, 1.442695
        %v1049 = vpow.pop %v1048
        %v1050 = vmul.f32 %v1047, 1.442695
        %v1051 = vpow.pop %v1050
        %v1052 = vadd.f32 %v1049, 1.0
        %v1053 = vadd.f32 %v1051, 1.0
        %v1054 = vrcp.pop %v1052
        %v1055 = vmul.f32 %v1052, %v1054
        %v1056 = vsub.f32 1.0, %v1055
        %v1057 = vmul.f32 %v1054, %v1056
        %v1058 = vadd.f32 %v1054, %v1057
        %vm1059 = vweird.f32 %v1052
        %vm1060 = vweird.f32 %v1054
        %vm1061 = vmor %vm1059, %vm1060
        %v1062 = vsel %vm1061, %v1054, %v1058
        %v1063 = vand.u32 2147483647, %v1052
        %vm1064 = vcmp.eq.f32.partialorder %v1063, 8.507059e+37
        %v1065 = vand.u32 %v1052, 2147483648
        %v1066 = vor.u32 1.1754944e-38, %v1065
        %v1067 = vsel %vm1064, %v1066, %v1062
        %v1068 = vmul.f32 1.0, %v1067
        %v1069 = vrcp.pop %v1053
        %v1070 = vmul.f32 %v1053, %v1069
        %v1071 = vsub.f32 1.0, %v1070
        %v1072 = vmul.f32 %v1069, %v1071
        %v1073 = vadd.f32 %v1069, %v1072
        %vm1074 = vweird.f32 %v1053
        %vm1075 = vweird.f32 %v1069
        %vm1076 = vmor %vm1074, %vm1075
        %v1077 = vsel %vm1076, %v1069, %v1073
        %v1078 = vand.u32 2147483647, %v1053
        %vm1079 = vcmp.eq.f32.partialorder %v1078, 8.507059e+37
        %v1080 = vand.u32 %v1053, 2147483648
        %v1081 = vor.u32 1.1754944e-38, %v1080
        %v1082 = vsel %vm1079, %v1081, %v1077
        %v1083 = vmul.f32 1.0, %v1082
        %v1084 = vxor.u32 %v1039, 2147483648
        %v1085 = vxor.u32 %v1043, 2147483648
        %v1086 = vmul.f32 %v1084, 1.442695
        %v1087 = vpow.pop %v1086
        %v1088 = vmul.f32 %v1085, 1.442695
        %v1089 = vpow.pop %v1088
        %v1090 = vadd.f32 %v1087, 1.0
        %v1091 = vadd.f32 %v1089, 1.0
        %v1092 = vrcp.pop %v1090
        %v1093 = vmul.f32 %v1090, %v1092
        %v1094 = vsub.f32 1.0, %v1093
        %v1095 = vmul.f32 %v1092, %v1094
        %v1096 = vadd.f32 %v1092, %v1095
        %vm1097 = vweird.f32 %v1090
        %vm1098 = vweird.f32 %v1092
        %vm1099 = vmor %vm1097, %vm1098
        %v1100 = vsel %vm1099, %v1092, %v1096
        %v1101 = vand.u32 2147483647, %v1090
        %vm1102 = vcmp.eq.f32.partialorder %v1101, 8.507059e+37
        %v1103 = vand.u32 %v1090, 2147483648
        %v1104 = vor.u32 1.1754944e-38, %v1103
        %v1105 = vsel %vm1102, %v1104, %v1100
        %v1106 = vmul.f32 1.0, %v1105
        %v1107 = vrcp.pop %v1091
        %v1108 = vmul.f32 %v1091, %v1107
        %v1109 = vsub.f32 1.0, %v1108
        %v1110 = vmul.f32 %v1107, %v1109
        %v1111 = vadd.f32 %v1107, %v1110
        %vm1112 = vweird.f32 %v1091
        %vm1113 = vweird.f32 %v1107
        %vm1114 = vmor %vm1112, %vm1113
        %v1115 = vsel %vm1114, %v1107, %v1111
        %v1116 = vand.u32 2147483647, %v1091
        %vm1117 = vcmp.eq.f32.partialorder %v1116, 8.507059e+37
        %v1118 = vand.u32 %v1091, 2147483648
        %v1119 = vor.u32 1.1754944e-38, %v1118
        %v1120 = vsel %vm1117, %v1119, %v1115
        %v1121 = vmul.f32 1.0, %v1120
        %v1122 = vtanh.pop %v1040
        %v1123 = vtanh.pop %v1044
        %v1124 = vxor.u32 %v1041, 2147483648
        %v1125 = vxor.u32 %v1045, 2147483648
        %v1126 = vmul.f32 %v1124, 1.442695
        %v1127 = vpow.pop %v1126
        %v1128 = vmul.f32 %v1125, 1.442695
        %v1129 = vpow.pop %v1128
        %v1130 = vadd.f32 %v1127, 1.0
        %v1131 = vadd.f32 %v1129, 1.0
        %v1132 = vrcp.pop %v1130
        %v1133 = vmul.f32 %v1130, %v1132
        %v1134 = vsub.f32 1.0, %v1133
        %v1135 = vmul.f32 %v1132, %v1134
        %v1136 = vadd.f32 %v1132, %v1135
        %vm1137 = vweird.f32 %v1130
        %vm1138 = vweird.f32 %v1132
        %vm1139 = vmor %vm1137, %vm1138
        %v1140 = vsel %vm1139, %v1132, %v1136
        %v1141 = vand.u32 2147483647, %v1130
        %vm1142 = vcmp.eq.f32.partialorder %v1141, 8.507059e+37
        %v1143 = vand.u32 %v1130, 2147483648
        %v1144 = vor.u32 1.1754944e-38, %v1143
        %v1145 = vsel %vm1142, %v1144, %v1140
        %v1146 = vmul.f32 1.0, %v1145
        %v1147 = vrcp.pop %v1131
        %v1148 = vmul.f32 %v1131, %v1147
        %v1149 = vsub.f32 1.0, %v1148
        %v1150 = vmul.f32 %v1147, %v1149
        %v1151 = vadd.f32 %v1147, %v1150
        %vm1152 = vweird.f32 %v1131
        %vm1153 = vweird.f32 %v1147
        %vm1154 = vmor %vm1152, %vm1153
        %v1155 = vsel %vm1154, %v1147, %v1151
        %v1156 = vand.u32 2147483647, %v1131
        %vm1157 = vcmp.eq.f32.partialorder %v1156, 8.507059e+37
        %v1158 = vand.u32 %v1131, 2147483648
        %v1159 = vor.u32 1.1754944e-38, %v1158
        %v1160 = vsel %vm1157, %v1159, %v1155
        %v1161 = vmul.f32 1.0, %v1160
        %v1162 = vmul.f32 %v1106, %v779
        %v1163 = vmul.f32 %v1121, %v780
        %v1164 = vmul.f32 %v1068, %v1122
        %v1165 = vmul.f32 %v1083, %v1123
        %v1166 = vadd.f32 %v1162, %v1164
        %v1167 = vadd.f32 %v1163, %v1165
        %v1168 = vtanh.pop %v1166
        %v1169 = vtanh.pop %v1167
        %v1170 = vmul.f32 %v1146, %v1168
        %v1171 = vmul.f32 %v1161, %v1169
        %v1172 = vstv %s776
        %vm1173 = vcmp.gt.s32.totalorder %v774, %v1172
        %vm1174 = vcmp.gt.s32.totalorder %v775, %v1172
        %v1175 = vsel %vm1173, 1, 0
        %v1176 = vsel %vm1174, 1, 0
        %1177 = vset.pattern.permute.xlu0 0
        %1178 = vperm.xlu0 %1177, %v1175
        %v1179 = vpop.permute.xlu0 %1178
        %1180 = vset.pattern.permute.xlu0 0
        %1181 = vperm.xlu0 %1180, %v1176
        %v1182 = vpop.permute.xlu0 %1181
        %vm1183 = vcmp.eq.s32.totalorder %v1179, 1
        %vm1184 = vcmp.eq.s32.totalorder %v1182, 1
        %v1185 = vsel %vm1183, %v1170, %v777
        %v1186 = vsel %vm1184, %v1171, %v778
        %1187 = vst [vmem:[#allocation2] sm:$0xff] %v1185
        %1188 = vst [vmem:[#allocation2 + $0x8] sm:$0xff] %v1186
        %v1189 = vsel %vm1183, %v1166, %v779
        %v1190 = vsel %vm1184, %v1167, %v780
        %1191 = vst [vmem:[#allocation3] sm:$0xff] %v1189
        %1192 = vst [vmem:[#allocation3 + $0x8] sm:$0xff] %v1190
        %v1193 = vld [vmem:[#allocation2] sm:$0xff]
        %v1194 = vld [vmem:[#allocation2 + $0x8] sm:$0xff]
        %v1195 = vld [vmem:[#allocation3] sm:$0xff]
        %v1196 = vld [vmem:[#allocation3 + $0x8] sm:$0xff]
        %s1197 = scalar_lea.vmem [#allocation4], 64
        %v1198 = vld [vmem:[%s1197] sm:$0xff]
        %v1199 = vld [vmem:[%s1197 + $0x8] sm:$0xff]
        %v1200 = vld [vmem:[%s1197 + $0x10] sm:$0xff]
        %v1201 = vld [vmem:[%s1197 + $0x18] sm:$0xff]
        %v1202 = vld [vmem:[%s1197 + $0x20] sm:$0xff]
        %v1203 = vld [vmem:[%s1197 + $0x28] sm:$0xff]
        %v1204 = vld [vmem:[%s1197 + $0x30] sm:$0xff]
        %v1205 = vld [vmem:[%s1197 + $0x38] sm:$0xff]
        %v1206 = vpack.c.bf16 %v1194, %v1193
        %v1207 = vld [vmem:[#allocation8] sm:$0xff]
        %v1208 = vld [vmem:[#allocation8 + $0x8] sm:$0xff]
        %v1209 = vld [vmem:[#allocation8 + $0x10] sm:$0xff]
        %v1210 = vld [vmem:[#allocation8 + $0x18] sm:$0xff]
        %v1211 = vld [vmem:[#allocation8 + $0x20] sm:$0xff]
        %v1212 = vld [vmem:[#allocation8 + $0x28] sm:$0xff]
        %v1213 = vld [vmem:[#allocation8 + $0x30] sm:$0xff]
        %v1214 = vld [vmem:[#allocation8 + $0x38] sm:$0xff]
        %v1215 = vld [vmem:[#allocation8 + $0x40] sm:$0xff]
        %v1216 = vld [vmem:[#allocation8 + $0x48] sm:$0xff]
        %v1217 = vld [vmem:[#allocation8 + $0x50] sm:$0xff]
        %v1218 = vld [vmem:[#allocation8 + $0x58] sm:$0xff]
        %v1219 = vld [vmem:[#allocation8 + $0x60] sm:$0xff]
        %v1220 = vld [vmem:[#allocation8 + $0x68] sm:$0xff]
        %v1221 = vld [vmem:[#allocation8 + $0x70] sm:$0xff]
        %v1222 = vld [vmem:[#allocation8 + $0x78] sm:$0xff]
        %v1223 = vld [vmem:[#allocation8 + $0x80] sm:$0xff]
        %v1224 = vld [vmem:[#allocation8 + $0x88] sm:$0xff]
        %v1225 = vld [vmem:[#allocation8 + $0x90] sm:$0xff]
        %v1226 = vld [vmem:[#allocation8 + $0x98] sm:$0xff]
        %v1227 = vld [vmem:[#allocation8 + $0xa0] sm:$0xff]
        %v1228 = vld [vmem:[#allocation8 + $0xa8] sm:$0xff]
        %v1229 = vld [vmem:[#allocation8 + $0xb0] sm:$0xff]
        %v1230 = vld [vmem:[#allocation8 + $0xb8] sm:$0xff]
        %v1231 = vld [vmem:[#allocation8 + $0xc0] sm:$0xff]
        %v1232 = vld [vmem:[#allocation8 + $0xc8] sm:$0xff]
        %v1233 = vld [vmem:[#allocation8 + $0xd0] sm:$0xff]
        %v1234 = vld [vmem:[#allocation8 + $0xd8] sm:$0xff]
        %v1235 = vld [vmem:[#allocation8 + $0xe0] sm:$0xff]
        %v1236 = vld [vmem:[#allocation8 + $0xe8] sm:$0xff]
        %v1237 = vld [vmem:[#allocation8 + $0xf0] sm:$0xff]
        %v1238 = vld [vmem:[#allocation8 + $0xf8] sm:$0xff]
        %v1271 = vunpack.c.l.b16 %v1207
        %v1272 = vunpack.c.h.b16 %v1207
        %v1273 = vunpack.c.l.b16 %v1208
        %v1274 = vunpack.c.h.b16 %v1208
        %v1275 = vunpack.c.l.b16 %v1209
        %v1276 = vunpack.c.h.b16 %v1209
        %v1277 = vunpack.c.l.b16 %v1210
        %v1278 = vunpack.c.h.b16 %v1210
        %v1279 = vunpack.c.l.b16 %v1211
        %v1280 = vunpack.c.h.b16 %v1211
        %v1281 = vunpack.c.l.b16 %v1212
        %v1282 = vunpack.c.h.b16 %v1212
        %v1283 = vunpack.c.l.b16 %v1213
        %v1284 = vunpack.c.h.b16 %v1213
        %v1285 = vunpack.c.l.b16 %v1214
        %v1286 = vunpack.c.h.b16 %v1214
        %v1287 = vunpack.c.l.b16 %v1215
        %v1288 = vunpack.c.h.b16 %v1215
        %v1289 = vunpack.c.l.b16 %v1216
        %v1290 = vunpack.c.h.b16 %v1216
        %v1291 = vunpack.c.l.b16 %v1217
        %v1292 = vunpack.c.h.b16 %v1217
        %v1293 = vunpack.c.l.b16 %v1218
        %v1294 = vunpack.c.h.b16 %v1218
        %v1295 = vunpack.c.l.b16 %v1219
        %v1296 = vunpack.c.h.b16 %v1219
        %v1297 = vunpack.c.l.b16 %v1220
        %v1298 = vunpack.c.h.b16 %v1220
        %v1299 = vunpack.c.l.b16 %v1221
        %v1300 = vunpack.c.h.b16 %v1221
        %v1301 = vunpack.c.l.b16 %v1222
        %v1302 = vunpack.c.h.b16 %v1222
        %v1303 = vunpack.c.l.b16 %v1223
        %v1304 = vunpack.c.h.b16 %v1223
        %v1305 = vunpack.c.l.b16 %v1224
        %v1306 = vunpack.c.h.b16 %v1224
        %v1307 = vunpack.c.l.b16 %v1225
        %v1308 = vunpack.c.h.b16 %v1225
        %v1309 = vunpack.c.l.b16 %v1226
        %v1310 = vunpack.c.h.b16 %v1226
        %v1311 = vunpack.c.l.b16 %v1227
        %v1312 = vunpack.c.h.b16 %v1227
        %v1313 = vunpack.c.l.b16 %v1228
        %v1314 = vunpack.c.h.b16 %v1228
        %v1315 = vunpack.c.l.b16 %v1229
        %v1316 = vunpack.c.h.b16 %v1229
        %v1317 = vunpack.c.l.b16 %v1230
        %v1318 = vunpack.c.h.b16 %v1230
        %v1319 = vunpack.c.l.b16 %v1231
        %v1320 = vunpack.c.h.b16 %v1231
        %v1321 = vunpack.c.l.b16 %v1232
        %v1322 = vunpack.c.h.b16 %v1232
        %v1323 = vunpack.c.l.b16 %v1233
        %v1324 = vunpack.c.h.b16 %v1233
        %v1325 = vunpack.c.l.b16 %v1234
        %v1326 = vunpack.c.h.b16 %v1234
        %v1327 = vunpack.c.l.b16 %v1235
        %v1328 = vunpack.c.h.b16 %v1235
        %v1329 = vunpack.c.l.b16 %v1236
        %v1330 = vunpack.c.h.b16 %v1236
        %v1331 = vunpack.c.l.b16 %v1237
        %v1332 = vunpack.c.h.b16 %v1237
        %v1333 = vunpack.c.l.b16 %v1238
        %v1334 = vunpack.c.h.b16 %v1238
        %v1335 = vpack.c.b16 %v1275, %v1271
        %v1336 = vpack.c.b16 %v1276, %v1272
        %v1337 = vpack.c.b16 %v1277, %v1273
        %v1338 = vpack.c.b16 %v1278, %v1274
        %v1339 = vpack.c.b16 %v1283, %v1279
        %v1340 = vpack.c.b16 %v1284, %v1280
        %v1341 = vpack.c.b16 %v1285, %v1281
        %v1342 = vpack.c.b16 %v1286, %v1282
        %v1343 = vpack.c.b16 %v1291, %v1287
        %v1344 = vpack.c.b16 %v1292, %v1288
        %v1345 = vpack.c.b16 %v1293, %v1289
        %v1346 = vpack.c.b16 %v1294, %v1290
        %v1347 = vpack.c.b16 %v1299, %v1295
        %v1348 = vpack.c.b16 %v1300, %v1296
        %v1349 = vpack.c.b16 %v1301, %v1297
        %v1350 = vpack.c.b16 %v1302, %v1298
        %v1351 = vpack.c.b16 %v1307, %v1303
        %v1352 = vpack.c.b16 %v1308, %v1304
        %v1353 = vpack.c.b16 %v1309, %v1305
        %v1354 = vpack.c.b16 %v1310, %v1306
        %v1355 = vpack.c.b16 %v1315, %v1311
        %v1356 = vpack.c.b16 %v1316, %v1312
        %v1357 = vpack.c.b16 %v1317, %v1313
        %v1358 = vpack.c.b16 %v1318, %v1314
        %v1359 = vpack.c.b16 %v1323, %v1319
        %v1360 = vpack.c.b16 %v1324, %v1320
        %v1361 = vpack.c.b16 %v1325, %v1321
        %v1362 = vpack.c.b16 %v1326, %v1322
        %v1363 = vpack.c.b16 %v1331, %v1327
        %v1364 = vpack.c.b16 %v1332, %v1328
        %v1365 = vpack.c.b16 %v1333, %v1329
        %v1366 = vpack.c.b16 %v1334, %v1330
        %1399 = vmatpush.bf16.msra.mxu0 %v1363
        %1400 = vmatpush.bf16.msra.mxu0 %v1359
        %1401 = vmatpush.bf16.msra.mxu0 %v1355
        %1402 = vmatpush.bf16.msra.mxu0 %v1351
        %1403 = vmatpush.bf16.msra.mxu0 %v1347
        %1404 = vmatpush.bf16.msra.mxu0 %v1343
        %1405 = vmatpush.bf16.msra.mxu0 %v1339
        %1406 = vmatpush.bf16.msra.mxu0 %v1335
        %1407 = vmatmul.bf16.gmra.mxu0 %v1206
        %v1408 = vpop.f32.mrf.mxu0
        %v1409 = vadd.f32 0.0, %v1408
        %v1410 = vpop.f32.mrf.mxu0
        %v1411 = vadd.f32 0.0, %v1410
        %1412 = vdwg.mxu0
        %1413 = vmatpush.bf16.msra.mxu0 %v1364
        %1414 = vmatpush.bf16.msra.mxu0 %v1360
        %1415 = vmatpush.bf16.msra.mxu0 %v1356
        %1416 = vmatpush.bf16.msra.mxu0 %v1352
        %1417 = vmatpush.bf16.msra.mxu0 %v1348
        %1418 = vmatpush.bf16.msra.mxu0 %v1344
        %1419 = vmatpush.bf16.msra.mxu0 %v1340
        %1420 = vmatpush.bf16.msra.mxu0 %v1336
        %1421 = vmatmul.bf16.gmra.mxu0 %v1206
        %v1422 = vpop.f32.mrf.mxu0
        %v1423 = vadd.f32 0.0, %v1422
        %v1424 = vpop.f32.mrf.mxu0
        %v1425 = vadd.f32 0.0, %v1424
        %1426 = vdwg.mxu0
        %1427 = vmatpush.bf16.msra.mxu0 %v1365
        %1428 = vmatpush.bf16.msra.mxu0 %v1361
        %1429 = vmatpush.bf16.msra.mxu0 %v1357
        %1430 = vmatpush.bf16.msra.mxu0 %v1353
        %1431 = vmatpush.bf16.msra.mxu0 %v1349
        %1432 = vmatpush.bf16.msra.mxu0 %v1345
        %1433 = vmatpush.bf16.msra.mxu0 %v1341
        %1434 = vmatpush.bf16.msra.mxu0 %v1337
        %1435 = vmatmul.bf16.gmra.mxu0 %v1206
        %v1436 = vpop.f32.mrf.mxu0
        %v1437 = vadd.f32 0.0, %v1436
        %v1438 = vpop.f32.mrf.mxu0
        %v1439 = vadd.f32 0.0, %v1438
        %1440 = vdwg.mxu0
        %1441 = vmatpush.bf16.msra.mxu0 %v1366
        %1442 = vmatpush.bf16.msra.mxu0 %v1362
        %1443 = vmatpush.bf16.msra.mxu0 %v1358
        %1444 = vmatpush.bf16.msra.mxu0 %v1354
        %1445 = vmatpush.bf16.msra.mxu0 %v1350
        %1446 = vmatpush.bf16.msra.mxu0 %v1346
        %1447 = vmatpush.bf16.msra.mxu0 %v1342
        %1448 = vmatpush.bf16.msra.mxu0 %v1338
        %1449 = vmatmul.bf16.gmra.mxu0 %v1206
        %v1450 = vpop.f32.mrf.mxu0
        %v1451 = vadd.f32 0.0, %v1450
        %v1452 = vpop.f32.mrf.mxu0
        %v1453 = vadd.f32 0.0, %v1452
        %1454 = vdwg.mxu0
        %v1455 = vadd.f32 %v1198, %v1409
        %v1456 = vadd.f32 %v1199, %v1423
        %v1457 = vadd.f32 %v1200, %v1437
        %v1458 = vadd.f32 %v1201, %v1451
        %v1459 = vadd.f32 %v1202, %v1411
        %v1460 = vadd.f32 %v1203, %v1425
        %v1461 = vadd.f32 %v1204, %v1439
        %v1462 = vadd.f32 %v1205, %v1453
        %v1463 = vxor.u32 %v1455, 2147483648
        %v1464 = vxor.u32 %v1459, 2147483648
        %v1465 = vmul.f32 %v1463, 1.442695
        %v1466 = vpow.pop %v1465
        %v1467 = vmul.f32 %v1464, 1.442695
        %v1468 = vpow.pop %v1467
        %v1469 = vadd.f32 %v1466, 1.0
        %v1470 = vadd.f32 %v1468, 1.0
        %v1471 = vrcp.pop %v1469
        %v1472 = vmul.f32 %v1469, %v1471
        %v1473 = vsub.f32 1.0, %v1472
        %v1474 = vmul.f32 %v1471, %v1473
        %v1475 = vadd.f32 %v1471, %v1474
        %vm1476 = vweird.f32 %v1469
        %vm1477 = vweird.f32 %v1471
        %vm1478 = vmor %vm1476, %vm1477
        %v1479 = vsel %vm1478, %v1471, %v1475
        %v1480 = vand.u32 2147483647, %v1469
        %vm1481 = vcmp.eq.f32.partialorder %v1480, 8.507059e+37
        %v1482 = vand.u32 %v1469, 2147483648
        %v1483 = vor.u32 1.1754944e-38, %v1482
        %v1484 = vsel %vm1481, %v1483, %v1479
        %v1485 = vmul.f32 1.0, %v1484
        %v1486 = vrcp.pop %v1470
        %v1487 = vmul.f32 %v1470, %v1486
        %v1488 = vsub.f32 1.0, %v1487
        %v1489 = vmul.f32 %v1486, %v1488
        %v1490 = vadd.f32 %v1486, %v1489
        %vm1491 = vweird.f32 %v1470
        %vm1492 = vweird.f32 %v1486
        %vm1493 = vmor %vm1491, %vm1492
        %v1494 = vsel %vm1493, %v1486, %v1490
        %v1495 = vand.u32 2147483647, %v1470
        %vm1496 = vcmp.eq.f32.partialorder %v1495, 8.507059e+37
        %v1497 = vand.u32 %v1470, 2147483648
        %v1498 = vor.u32 1.1754944e-38, %v1497
        %v1499 = vsel %vm1496, %v1498, %v1494
        %v1500 = vmul.f32 1.0, %v1499
        %v1501 = vxor.u32 %v1456, 2147483648
        %v1502 = vxor.u32 %v1460, 2147483648
        %v1503 = vmul.f32 %v1501, 1.442695
        %v1504 = vpow.pop %v1503
        %v1505 = vmul.f32 %v1502, 1.442695
        %v1506 = vpow.pop %v1505
        %v1507 = vadd.f32 %v1504, 1.0
        %v1508 = vadd.f32 %v1506, 1.0
        %v1509 = vrcp.pop %v1507
        %v1510 = vmul.f32 %v1507, %v1509
        %v1511 = vsub.f32 1.0, %v1510
        %v1512 = vmul.f32 %v1509, %v1511
        %v1513 = vadd.f32 %v1509, %v1512
        %vm1514 = vweird.f32 %v1507
        %vm1515 = vweird.f32 %v1509
        %vm1516 = vmor %vm1514, %vm1515
        %v1517 = vsel %vm1516, %v1509, %v1513
        %v1518 = vand.u32 2147483647, %v1507
        %vm1519 = vcmp.eq.f32.partialorder %v1518, 8.507059e+37
        %v1520 = vand.u32 %v1507, 2147483648
        %v1521 = vor.u32 1.1754944e-38, %v1520
        %v1522 = vsel %vm1519, %v1521, %v1517
        %v1523 = vmul.f32 1.0, %v1522
        %v1524 = vrcp.pop %v1508
        %v1525 = vmul.f32 %v1508, %v1524
        %v1526 = vsub.f32 1.0, %v1525
        %v1527 = vmul.f32 %v1524, %v1526
        %v1528 = vadd.f32 %v1524, %v1527
        %vm1529 = vweird.f32 %v1508
        %vm1530 = vweird.f32 %v1524
        %vm1531 = vmor %vm1529, %vm1530
        %v1532 = vsel %vm1531, %v1524, %v1528
        %v1533 = vand.u32 2147483647, %v1508
        %vm1534 = vcmp.eq.f32.partialorder %v1533, 8.507059e+37
        %v1535 = vand.u32 %v1508, 2147483648
        %v1536 = vor.u32 1.1754944e-38, %v1535
        %v1537 = vsel %vm1534, %v1536, %v1532
        %v1538 = vmul.f32 1.0, %v1537
        %v1539 = vtanh.pop %v1457
        %v1540 = vtanh.pop %v1461
        %v1541 = vxor.u32 %v1458, 2147483648
        %v1542 = vxor.u32 %v1462, 2147483648
        %v1543 = vmul.f32 %v1541, 1.442695
        %v1544 = vpow.pop %v1543
        %v1545 = vmul.f32 %v1542, 1.442695
        %v1546 = vpow.pop %v1545
        %v1547 = vadd.f32 %v1544, 1.0
        %v1548 = vadd.f32 %v1546, 1.0
        %v1549 = vrcp.pop %v1547
        %v1550 = vmul.f32 %v1547, %v1549
        %v1551 = vsub.f32 1.0, %v1550
        %v1552 = vmul.f32 %v1549, %v1551
        %v1553 = vadd.f32 %v1549, %v1552
        %vm1554 = vweird.f32 %v1547
        %vm1555 = vweird.f32 %v1549
        %vm1556 = vmor %vm1554, %vm1555
        %v1557 = vsel %vm1556, %v1549, %v1553
        %v1558 = vand.u32 2147483647, %v1547
        %vm1559 = vcmp.eq.f32.partialorder %v1558, 8.507059e+37
        %v1560 = vand.u32 %v1547, 2147483648
        %v1561 = vor.u32 1.1754944e-38, %v1560
        %v1562 = vsel %vm1559, %v1561, %v1557
        %v1563 = vmul.f32 1.0, %v1562
        %v1564 = vrcp.pop %v1548
        %v1565 = vmul.f32 %v1548, %v1564
        %v1566 = vsub.f32 1.0, %v1565
        %v1567 = vmul.f32 %v1564, %v1566
        %v1568 = vadd.f32 %v1564, %v1567
        %vm1569 = vweird.f32 %v1548
        %vm1570 = vweird.f32 %v1564
        %vm1571 = vmor %vm1569, %vm1570
        %v1572 = vsel %vm1571, %v1564, %v1568
        %v1573 = vand.u32 2147483647, %v1548
        %vm1574 = vcmp.eq.f32.partialorder %v1573, 8.507059e+37
        %v1575 = vand.u32 %v1548, 2147483648
        %v1576 = vor.u32 1.1754944e-38, %v1575
        %v1577 = vsel %vm1574, %v1576, %v1572
        %v1578 = vmul.f32 1.0, %v1577
        %v1579 = vmul.f32 %v1523, %v1195
        %v1580 = vmul.f32 %v1538, %v1196
        %v1581 = vmul.f32 %v1485, %v1539
        %v1582 = vmul.f32 %v1500, %v1540
        %v1583 = vadd.f32 %v1579, %v1581
        %v1584 = vadd.f32 %v1580, %v1582
        %v1585 = vtanh.pop %v1583
        %v1586 = vtanh.pop %v1584
        %v1587 = vmul.f32 %v1563, %v1585
        %v1588 = vmul.f32 %v1578, %v1586
        %s1589 = sadd.s32 %s776, 1
        %v1590 = vstv %s1589
        %vm1591 = vcmp.gt.s32.totalorder %v774, %v1590
        %vm1592 = vcmp.gt.s32.totalorder %v775, %v1590
        %v1593 = vsel %vm1591, 1, 0
        %v1594 = vsel %vm1592, 1, 0
        %1595 = vset.pattern.permute.xlu0 0
        %1596 = vperm.xlu0 %1595, %v1593
        %v1597 = vpop.permute.xlu0 %1596
        %1598 = vset.pattern.permute.xlu0 0
        %1599 = vperm.xlu0 %1598, %v1594
        %v1600 = vpop.permute.xlu0 %1599
        %vm1601 = vcmp.eq.s32.totalorder %v1597, 1
        %vm1602 = vcmp.eq.s32.totalorder %v1600, 1
        %v1603 = vsel %vm1601, %v1587, %v1193
        %v1604 = vsel %vm1602, %v1588, %v1194
        %1605 = vst [vmem:[#allocation2] sm:$0xff] %v1603
        %1606 = vst [vmem:[#allocation2 + $0x8] sm:$0xff] %v1604
        %v1607 = vsel %vm1601, %v1583, %v1195
        %v1608 = vsel %vm1602, %v1584, %v1196
        %1609 = vst [vmem:[#allocation3] sm:$0xff] %v1607
        %1610 = vst [vmem:[#allocation3 + $0x8] sm:$0xff] %v1608
        %v1611 = vld [vmem:[#allocation2] sm:$0xff]
        %v1612 = vld [vmem:[#allocation2 + $0x8] sm:$0xff]
        %v1613 = vld [vmem:[#allocation3] sm:$0xff]
        %v1614 = vld [vmem:[#allocation3 + $0x8] sm:$0xff]
        %s1615 = scalar_lea.vmem [#allocation4], 128
        %v1616 = vld [vmem:[%s1615] sm:$0xff]
        %v1617 = vld [vmem:[%s1615 + $0x8] sm:$0xff]
        %v1618 = vld [vmem:[%s1615 + $0x10] sm:$0xff]
        %v1619 = vld [vmem:[%s1615 + $0x18] sm:$0xff]
        %v1620 = vld [vmem:[%s1615 + $0x20] sm:$0xff]
        %v1621 = vld [vmem:[%s1615 + $0x28] sm:$0xff]
        %v1622 = vld [vmem:[%s1615 + $0x30] sm:$0xff]
        %v1623 = vld [vmem:[%s1615 + $0x38] sm:$0xff]
        %v1624 = vpack.c.bf16 %v1612, %v1611
        %v1625 = vld [vmem:[#allocation8] sm:$0xff]
        %v1626 = vld [vmem:[#allocation8 + $0x8] sm:$0xff]
        %v1627 = vld [vmem:[#allocation8 + $0x10] sm:$0xff]
        %v1628 = vld [vmem:[#allocation8 + $0x18] sm:$0xff]
        %v1629 = vld [vmem:[#allocation8 + $0x20] sm:$0xff]
        %v1630 = vld [vmem:[#allocation8 + $0x28] sm:$0xff]
        %v1631 = vld [vmem:[#allocation8 + $0x30] sm:$0xff]
        %v1632 = vld [vmem:[#allocation8 + $0x38] sm:$0xff]
        %v1633 = vld [vmem:[#allocation8 + $0x40] sm:$0xff]
        %v1634 = vld [vmem:[#allocation8 + $0x48] sm:$0xff]
        %v1635 = vld [vmem:[#allocation8 + $0x50] sm:$0xff]
        %v1636 = vld [vmem:[#allocation8 + $0x58] sm:$0xff]
        %v1637 = vld [vmem:[#allocation8 + $0x60] sm:$0xff]
        %v1638 = vld [vmem:[#allocation8 + $0x68] sm:$0xff]
        %v1639 = vld [vmem:[#allocation8 + $0x70] sm:$0xff]
        %v1640 = vld [vmem:[#allocation8 + $0x78] sm:$0xff]
        %v1641 = vld [vmem:[#allocation8 + $0x80] sm:$0xff]
        %v1642 = vld [vmem:[#allocation8 + $0x88] sm:$0xff]
        %v1643 = vld [vmem:[#allocation8 + $0x90] sm:$0xff]
        %v1644 = vld [vmem:[#allocation8 + $0x98] sm:$0xff]
        %v1645 = vld [vmem:[#allocation8 + $0xa0] sm:$0xff]
        %v1646 = vld [vmem:[#allocation8 + $0xa8] sm:$0xff]
        %v1647 = vld [vmem:[#allocation8 + $0xb0] sm:$0xff]
        %v1648 = vld [vmem:[#allocation8 + $0xb8] sm:$0xff]
        %v1649 = vld [vmem:[#allocation8 + $0xc0] sm:$0xff]
        %v1650 = vld [vmem:[#allocation8 + $0xc8] sm:$0xff]
        %v1651 = vld [vmem:[#allocation8 + $0xd0] sm:$0xff]
        %v1652 = vld [vmem:[#allocation8 + $0xd8] sm:$0xff]
        %v1653 = vld [vmem:[#allocation8 + $0xe0] sm:$0xff]
        %v1654 = vld [vmem:[#allocation8 + $0xe8] sm:$0xff]
        %v1655 = vld [vmem:[#allocation8 + $0xf0] sm:$0xff]
        %v1656 = vld [vmem:[#allocation8 + $0xf8] sm:$0xff]
        %v1689 = vunpack.c.l.b16 %v1625
        %v1690 = vunpack.c.h.b16 %v1625
        %v1691 = vunpack.c.l.b16 %v1626
        %v1692 = vunpack.c.h.b16 %v1626
        %v1693 = vunpack.c.l.b16 %v1627
        %v1694 = vunpack.c.h.b16 %v1627
        %v1695 = vunpack.c.l.b16 %v1628
        %v1696 = vunpack.c.h.b16 %v1628
        %v1697 = vunpack.c.l.b16 %v1629
        %v1698 = vunpack.c.h.b16 %v1629
        %v1699 = vunpack.c.l.b16 %v1630
        %v1700 = vunpack.c.h.b16 %v1630
        %v1701 = vunpack.c.l.b16 %v1631
        %v1702 = vunpack.c.h.b16 %v1631
        %v1703 = vunpack.c.l.b16 %v1632
        %v1704 = vunpack.c.h.b16 %v1632
        %v1705 = vunpack.c.l.b16 %v1633
        %v1706 = vunpack.c.h.b16 %v1633
        %v1707 = vunpack.c.l.b16 %v1634
        %v1708 = vunpack.c.h.b16 %v1634
        %v1709 = vunpack.c.l.b16 %v1635
        %v1710 = vunpack.c.h.b16 %v1635
        %v1711 = vunpack.c.l.b16 %v1636
        %v1712 = vunpack.c.h.b16 %v1636
        %v1713 = vunpack.c.l.b16 %v1637
        %v1714 = vunpack.c.h.b16 %v1637
        %v1715 = vunpack.c.l.b16 %v1638
        %v1716 = vunpack.c.h.b16 %v1638
        %v1717 = vunpack.c.l.b16 %v1639
        %v1718 = vunpack.c.h.b16 %v1639
        %v1719 = vunpack.c.l.b16 %v1640
        %v1720 = vunpack.c.h.b16 %v1640
        %v1721 = vunpack.c.l.b16 %v1641
        %v1722 = vunpack.c.h.b16 %v1641
        %v1723 = vunpack.c.l.b16 %v1642
        %v1724 = vunpack.c.h.b16 %v1642
        %v1725 = vunpack.c.l.b16 %v1643
        %v1726 = vunpack.c.h.b16 %v1643
        %v1727 = vunpack.c.l.b16 %v1644
        %v1728 = vunpack.c.h.b16 %v1644
        %v1729 = vunpack.c.l.b16 %v1645
        %v1730 = vunpack.c.h.b16 %v1645
        %v1731 = vunpack.c.l.b16 %v1646
        %v1732 = vunpack.c.h.b16 %v1646
        %v1733 = vunpack.c.l.b16 %v1647
        %v1734 = vunpack.c.h.b16 %v1647
        %v1735 = vunpack.c.l.b16 %v1648
        %v1736 = vunpack.c.h.b16 %v1648
        %v1737 = vunpack.c.l.b16 %v1649
        %v1738 = vunpack.c.h.b16 %v1649
        %v1739 = vunpack.c.l.b16 %v1650
        %v1740 = vunpack.c.h.b16 %v1650
        %v1741 = vunpack.c.l.b16 %v1651
        %v1742 = vunpack.c.h.b16 %v1651
        %v1743 = vunpack.c.l.b16 %v1652
        %v1744 = vunpack.c.h.b16 %v1652
        %v1745 = vunpack.c.l.b16 %v1653
        %v1746 = vunpack.c.h.b16 %v1653
        %v1747 = vunpack.c.l.b16 %v1654
        %v1748 = vunpack.c.h.b16 %v1654
        %v1749 = vunpack.c.l.b16 %v1655
        %v1750 = vunpack.c.h.b16 %v1655
        %v1751 = vunpack.c.l.b16 %v1656
        %v1752 = vunpack.c.h.b16 %v1656
        %v1753 = vpack.c.b16 %v1693, %v1689
        %v1754 = vpack.c.b16 %v1694, %v1690
        %v1755 = vpack.c.b16 %v1695, %v1691
        %v1756 = vpack.c.b16 %v1696, %v1692
        %v1757 = vpack.c.b16 %v1701, %v1697
        %v1758 = vpack.c.b16 %v1702, %v1698
        %v1759 = vpack.c.b16 %v1703, %v1699
        %v1760 = vpack.c.b16 %v1704, %v1700
        %v1761 = vpack.c.b16 %v1709, %v1705
        %v1762 = vpack.c.b16 %v1710, %v1706
        %v1763 = vpack.c.b16 %v1711, %v1707
        %v1764 = vpack.c.b16 %v1712, %v1708
        %v1765 = vpack.c.b16 %v1717, %v1713
        %v1766 = vpack.c.b16 %v1718, %v1714
        %v1767 = vpack.c.b16 %v1719, %v1715
        %v1768 = vpack.c.b16 %v1720, %v1716
        %v1769 = vpack.c.b16 %v1725, %v1721
        %v1770 = vpack.c.b16 %v1726, %v1722
        %v1771 = vpack.c.b16 %v1727, %v1723
        %v1772 = vpack.c.b16 %v1728, %v1724
        %v1773 = vpack.c.b16 %v1733, %v1729
        %v1774 = vpack.c.b16 %v1734, %v1730
        %v1775 = vpack.c.b16 %v1735, %v1731
        %v1776 = vpack.c.b16 %v1736, %v1732
        %v1777 = vpack.c.b16 %v1741, %v1737
        %v1778 = vpack.c.b16 %v1742, %v1738
        %v1779 = vpack.c.b16 %v1743, %v1739
        %v1780 = vpack.c.b16 %v1744, %v1740
        %v1781 = vpack.c.b16 %v1749, %v1745
        %v1782 = vpack.c.b16 %v1750, %v1746
        %v1783 = vpack.c.b16 %v1751, %v1747
        %v1784 = vpack.c.b16 %v1752, %v1748
        %1817 = vmatpush.bf16.msra.mxu0 %v1781
        %1818 = vmatpush.bf16.msra.mxu0 %v1777
        %1819 = vmatpush.bf16.msra.mxu0 %v1773
        %1820 = vmatpush.bf16.msra.mxu0 %v1769
        %1821 = vmatpush.bf16.msra.mxu0 %v1765
        %1822 = vmatpush.bf16.msra.mxu0 %v1761
        %1823 = vmatpush.bf16.msra.mxu0 %v1757
        %1824 = vmatpush.bf16.msra.mxu0 %v1753
        %1825 = vmatmul.bf16.gmra.mxu0 %v1624
        %v1826 = vpop.f32.mrf.mxu0
        %v1827 = vadd.f32 0.0, %v1826
        %v1828 = vpop.f32.mrf.mxu0
        %v1829 = vadd.f32 0.0, %v1828
        %1830 = vdwg.mxu0
        %1831 = vmatpush.bf16.msra.mxu0 %v1782
        %1832 = vmatpush.bf16.msra.mxu0 %v1778
        %1833 = vmatpush.bf16.msra.mxu0 %v1774
        %1834 = vmatpush.bf16.msra.mxu0 %v1770
        %1835 = vmatpush.bf16.msra.mxu0 %v1766
        %1836 = vmatpush.bf16.msra.mxu0 %v1762
        %1837 = vmatpush.bf16.msra.mxu0 %v1758
        %1838 = vmatpush.bf16.msra.mxu0 %v1754
        %1839 = vmatmul.bf16.gmra.mxu0 %v1624
        %v1840 = vpop.f32.mrf.mxu0
        %v1841 = vadd.f32 0.0, %v1840
        %v1842 = vpop.f32.mrf.mxu0
        %v1843 = vadd.f32 0.0, %v1842
        %1844 = vdwg.mxu0
        %1845 = vmatpush.bf16.msra.mxu0 %v1783
        %1846 = vmatpush.bf16.msra.mxu0 %v1779
        %1847 = vmatpush.bf16.msra.mxu0 %v1775
        %1848 = vmatpush.bf16.msra.mxu0 %v1771
        %1849 = vmatpush.bf16.msra.mxu0 %v1767
        %1850 = vmatpush.bf16.msra.mxu0 %v1763
        %1851 = vmatpush.bf16.msra.mxu0 %v1759
        %1852 = vmatpush.bf16.msra.mxu0 %v1755
        %1853 = vmatmul.bf16.gmra.mxu0 %v1624
        %v1854 = vpop.f32.mrf.mxu0
        %v1855 = vadd.f32 0.0, %v1854
        %v1856 = vpop.f32.mrf.mxu0
        %v1857 = vadd.f32 0.0, %v1856
        %1858 = vdwg.mxu0
        %1859 = vmatpush.bf16.msra.mxu0 %v1784
        %1860 = vmatpush.bf16.msra.mxu0 %v1780
        %1861 = vmatpush.bf16.msra.mxu0 %v1776
        %1862 = vmatpush.bf16.msra.mxu0 %v1772
        %1863 = vmatpush.bf16.msra.mxu0 %v1768
        %1864 = vmatpush.bf16.msra.mxu0 %v1764
        %1865 = vmatpush.bf16.msra.mxu0 %v1760
        %1866 = vmatpush.bf16.msra.mxu0 %v1756
        %1867 = vmatmul.bf16.gmra.mxu0 %v1624
        %v1868 = vpop.f32.mrf.mxu0
        %v1869 = vadd.f32 0.0, %v1868
        %v1870 = vpop.f32.mrf.mxu0
        %v1871 = vadd.f32 0.0, %v1870
        %1872 = vdwg.mxu0
        %v1873 = vadd.f32 %v1616, %v1827
        %v1874 = vadd.f32 %v1617, %v1841
        %v1875 = vadd.f32 %v1618, %v1855
        %v1876 = vadd.f32 %v1619, %v1869
        %v1877 = vadd.f32 %v1620, %v1829
        %v1878 = vadd.f32 %v1621, %v1843
        %v1879 = vadd.f32 %v1622, %v1857
        %v1880 = vadd.f32 %v1623, %v1871
        %v1881 = vxor.u32 %v1873, 2147483648
        %v1882 = vxor.u32 %v1877, 2147483648
        %v1883 = vmul.f32 %v1881, 1.442695
        %v1884 = vpow.pop %v1883
        %v1885 = vmul.f32 %v1882, 1.442695
        %v1886 = vpow.pop %v1885
        %v1887 = vadd.f32 %v1884, 1.0
        %v1888 = vadd.f32 %v1886, 1.0
        %v1889 = vrcp.pop %v1887
        %v1890 = vmul.f32 %v1887, %v1889
        %v1891 = vsub.f32 1.0, %v1890
        %v1892 = vmul.f32 %v1889, %v1891
        %v1893 = vadd.f32 %v1889, %v1892
        %vm1894 = vweird.f32 %v1887
        %vm1895 = vweird.f32 %v1889
        %vm1896 = vmor %vm1894, %vm1895
        %v1897 = vsel %vm1896, %v1889, %v1893
        %v1898 = vand.u32 2147483647, %v1887
        %vm1899 = vcmp.eq.f32.partialorder %v1898, 8.507059e+37
        %v1900 = vand.u32 %v1887, 2147483648
        %v1901 = vor.u32 1.1754944e-38, %v1900
        %v1902 = vsel %vm1899, %v1901, %v1897
        %v1903 = vmul.f32 1.0, %v1902
        %v1904 = vrcp.pop %v1888
        %v1905 = vmul.f32 %v1888, %v1904
        %v1906 = vsub.f32 1.0, %v1905
        %v1907 = vmul.f32 %v1904, %v1906
        %v1908 = vadd.f32 %v1904, %v1907
        %vm1909 = vweird.f32 %v1888
        %vm1910 = vweird.f32 %v1904
        %vm1911 = vmor %vm1909, %vm1910
        %v1912 = vsel %vm1911, %v1904, %v1908
        %v1913 = vand.u32 2147483647, %v1888
        %vm1914 = vcmp.eq.f32.partialorder %v1913, 8.507059e+37
        %v1915 = vand.u32 %v1888, 2147483648
        %v1916 = vor.u32 1.1754944e-38, %v1915
        %v1917 = vsel %vm1914, %v1916, %v1912
        %v1918 = vmul.f32 1.0, %v1917
        %v1919 = vxor.u32 %v1874, 2147483648
        %v1920 = vxor.u32 %v1878, 2147483648
        %v1921 = vmul.f32 %v1919, 1.442695
        %v1922 = vpow.pop %v1921
        %v1923 = vmul.f32 %v1920, 1.442695
        %v1924 = vpow.pop %v1923
        %v1925 = vadd.f32 %v1922, 1.0
        %v1926 = vadd.f32 %v1924, 1.0
        %v1927 = vrcp.pop %v1925
        %v1928 = vmul.f32 %v1925, %v1927
        %v1929 = vsub.f32 1.0, %v1928
        %v1930 = vmul.f32 %v1927, %v1929
        %v1931 = vadd.f32 %v1927, %v1930
        %vm1932 = vweird.f32 %v1925
        %vm1933 = vweird.f32 %v1927
        %vm1934 = vmor %vm1932, %vm1933
        %v1935 = vsel %vm1934, %v1927, %v1931
        %v1936 = vand.u32 2147483647, %v1925
        %vm1937 = vcmp.eq.f32.partialorder %v1936, 8.507059e+37
        %v1938 = vand.u32 %v1925, 2147483648
        %v1939 = vor.u32 1.1754944e-38, %v1938
        %v1940 = vsel %vm1937, %v1939, %v1935
        %v1941 = vmul.f32 1.0, %v1940
        %v1942 = vrcp.pop %v1926
        %v1943 = vmul.f32 %v1926, %v1942
        %v1944 = vsub.f32 1.0, %v1943
        %v1945 = vmul.f32 %v1942, %v1944
        %v1946 = vadd.f32 %v1942, %v1945
        %vm1947 = vweird.f32 %v1926
        %vm1948 = vweird.f32 %v1942
        %vm1949 = vmor %vm1947, %vm1948
        %v1950 = vsel %vm1949, %v1942, %v1946
        %v1951 = vand.u32 2147483647, %v1926
        %vm1952 = vcmp.eq.f32.partialorder %v1951, 8.507059e+37
        %v1953 = vand.u32 %v1926, 2147483648
        %v1954 = vor.u32 1.1754944e-38, %v1953
        %v1955 = vsel %vm1952, %v1954, %v1950
        %v1956 = vmul.f32 1.0, %v1955
        %v1957 = vtanh.pop %v1875
        %v1958 = vtanh.pop %v1879
        %v1959 = vxor.u32 %v1876, 2147483648
        %v1960 = vxor.u32 %v1880, 2147483648
        %v1961 = vmul.f32 %v1959, 1.442695
        %v1962 = vpow.pop %v1961
        %v1963 = vmul.f32 %v1960, 1.442695
        %v1964 = vpow.pop %v1963
        %v1965 = vadd.f32 %v1962, 1.0
        %v1966 = vadd.f32 %v1964, 1.0
        %v1967 = vrcp.pop %v1965
        %v1968 = vmul.f32 %v1965, %v1967
        %v1969 = vsub.f32 1.0, %v1968
        %v1970 = vmul.f32 %v1967, %v1969
        %v1971 = vadd.f32 %v1967, %v1970
        %vm1972 = vweird.f32 %v1965
        %vm1973 = vweird.f32 %v1967
        %vm1974 = vmor %vm1972, %vm1973
        %v1975 = vsel %vm1974, %v1967, %v1971
        %v1976 = vand.u32 2147483647, %v1965
        %vm1977 = vcmp.eq.f32.partialorder %v1976, 8.507059e+37
        %v1978 = vand.u32 %v1965, 2147483648
        %v1979 = vor.u32 1.1754944e-38, %v1978
        %v1980 = vsel %vm1977, %v1979, %v1975
        %v1981 = vmul.f32 1.0, %v1980
        %v1982 = vrcp.pop %v1966
        %v1983 = vmul.f32 %v1966, %v1982
        %v1984 = vsub.f32 1.0, %v1983
        %v1985 = vmul.f32 %v1982, %v1984
        %v1986 = vadd.f32 %v1982, %v1985
        %vm1987 = vweird.f32 %v1966
        %vm1988 = vweird.f32 %v1982
        %vm1989 = vmor %vm1987, %vm1988
        %v1990 = vsel %vm1989, %v1982, %v1986
        %v1991 = vand.u32 2147483647, %v1966
        %vm1992 = vcmp.eq.f32.partialorder %v1991, 8.507059e+37
        %v1993 = vand.u32 %v1966, 2147483648
        %v1994 = vor.u32 1.1754944e-38, %v1993
        %v1995 = vsel %vm1992, %v1994, %v1990
        %v1996 = vmul.f32 1.0, %v1995
        %v1997 = vmul.f32 %v1941, %v1613
        %v1998 = vmul.f32 %v1956, %v1614
        %v1999 = vmul.f32 %v1903, %v1957
        %v2000 = vmul.f32 %v1918, %v1958
        %v2001 = vadd.f32 %v1997, %v1999
        %v2002 = vadd.f32 %v1998, %v2000
        %v2003 = vtanh.pop %v2001
        %v2004 = vtanh.pop %v2002
        %v2005 = vmul.f32 %v1981, %v2003
        %v2006 = vmul.f32 %v1996, %v2004
        %s2007 = sadd.s32 %s776, 2
        %v2008 = vstv %s2007
        %vm2009 = vcmp.gt.s32.totalorder %v774, %v2008
        %vm2010 = vcmp.gt.s32.totalorder %v775, %v2008
        %v2011 = vsel %vm2009, 1, 0
        %v2012 = vsel %vm2010, 1, 0
        %2013 = vset.pattern.permute.xlu0 0
        %2014 = vperm.xlu0 %2013, %v2011
        %v2015 = vpop.permute.xlu0 %2014
        %2016 = vset.pattern.permute.xlu0 0
        %2017 = vperm.xlu0 %2016, %v2012
        %v2018 = vpop.permute.xlu0 %2017
        %vm2019 = vcmp.eq.s32.totalorder %v2015, 1
        %vm2020 = vcmp.eq.s32.totalorder %v2018, 1
        %v2021 = vsel %vm2019, %v2005, %v1611
        %v2022 = vsel %vm2020, %v2006, %v1612
        %2023 = vst [vmem:[#allocation2] sm:$0xff] %v2021
        %2024 = vst [vmem:[#allocation2 + $0x8] sm:$0xff] %v2022
        %v2025 = vsel %vm2019, %v2001, %v1613
        %v2026 = vsel %vm2020, %v2002, %v1614
        %2027 = vst [vmem:[#allocation3] sm:$0xff] %v2025
        %2028 = vst [vmem:[#allocation3 + $0x8] sm:$0xff] %v2026
        %v2029 = vld [vmem:[#allocation2] sm:$0xff]
        %v2030 = vld [vmem:[#allocation2 + $0x8] sm:$0xff]
        %v2031 = vld [vmem:[#allocation3] sm:$0xff]
        %v2032 = vld [vmem:[#allocation3 + $0x8] sm:$0xff]
        %s2033 = scalar_lea.vmem [#allocation4], 192
        %v2034 = vld [vmem:[%s2033] sm:$0xff]
        %v2035 = vld [vmem:[%s2033 + $0x8] sm:$0xff]
        %v2036 = vld [vmem:[%s2033 + $0x10] sm:$0xff]
        %v2037 = vld [vmem:[%s2033 + $0x18] sm:$0xff]
        %v2038 = vld [vmem:[%s2033 + $0x20] sm:$0xff]
        %v2039 = vld [vmem:[%s2033 + $0x28] sm:$0xff]
        %v2040 = vld [vmem:[%s2033 + $0x30] sm:$0xff]
        %v2041 = vld [vmem:[%s2033 + $0x38] sm:$0xff]
        %v2042 = vpack.c.bf16 %v2030, %v2029
        %v2043 = vld [vmem:[#allocation8] sm:$0xff]
        %v2044 = vld [vmem:[#allocation8 + $0x8] sm:$0xff]
        %v2045 = vld [vmem:[#allocation8 + $0x10] sm:$0xff]
        %v2046 = vld [vmem:[#allocation8 + $0x18] sm:$0xff]
        %v2047 = vld [vmem:[#allocation8 + $0x20] sm:$0xff]
        %v2048 = vld [vmem:[#allocation8 + $0x28] sm:$0xff]
        %v2049 = vld [vmem:[#allocation8 + $0x30] sm:$0xff]
        %v2050 = vld [vmem:[#allocation8 + $0x38] sm:$0xff]
        %v2051 = vld [vmem:[#allocation8 + $0x40] sm:$0xff]
        %v2052 = vld [vmem:[#allocation8 + $0x48] sm:$0xff]
        %v2053 = vld [vmem:[#allocation8 + $0x50] sm:$0xff]
        %v2054 = vld [vmem:[#allocation8 + $0x58] sm:$0xff]
        %v2055 = vld [vmem:[#allocation8 + $0x60] sm:$0xff]
        %v2056 = vld [vmem:[#allocation8 + $0x68] sm:$0xff]
        %v2057 = vld [vmem:[#allocation8 + $0x70] sm:$0xff]
        %v2058 = vld [vmem:[#allocation8 + $0x78] sm:$0xff]
        %v2059 = vld [vmem:[#allocation8 + $0x80] sm:$0xff]
        %v2060 = vld [vmem:[#allocation8 + $0x88] sm:$0xff]
        %v2061 = vld [vmem:[#allocation8 + $0x90] sm:$0xff]
        %v2062 = vld [vmem:[#allocation8 + $0x98] sm:$0xff]
        %v2063 = vld [vmem:[#allocation8 + $0xa0] sm:$0xff]
        %v2064 = vld [vmem:[#allocation8 + $0xa8] sm:$0xff]
        %v2065 = vld [vmem:[#allocation8 + $0xb0] sm:$0xff]
        %v2066 = vld [vmem:[#allocation8 + $0xb8] sm:$0xff]
        %v2067 = vld [vmem:[#allocation8 + $0xc0] sm:$0xff]
        %v2068 = vld [vmem:[#allocation8 + $0xc8] sm:$0xff]
        %v2069 = vld [vmem:[#allocation8 + $0xd0] sm:$0xff]
        %v2070 = vld [vmem:[#allocation8 + $0xd8] sm:$0xff]
        %v2071 = vld [vmem:[#allocation8 + $0xe0] sm:$0xff]
        %v2072 = vld [vmem:[#allocation8 + $0xe8] sm:$0xff]
        %v2073 = vld [vmem:[#allocation8 + $0xf0] sm:$0xff]
        %v2074 = vld [vmem:[#allocation8 + $0xf8] sm:$0xff]
        %v2107 = vunpack.c.l.b16 %v2043
        %v2108 = vunpack.c.h.b16 %v2043
        %v2109 = vunpack.c.l.b16 %v2044
        %v2110 = vunpack.c.h.b16 %v2044
        %v2111 = vunpack.c.l.b16 %v2045
        %v2112 = vunpack.c.h.b16 %v2045
        %v2113 = vunpack.c.l.b16 %v2046
        %v2114 = vunpack.c.h.b16 %v2046
        %v2115 = vunpack.c.l.b16 %v2047
        %v2116 = vunpack.c.h.b16 %v2047
        %v2117 = vunpack.c.l.b16 %v2048
        %v2118 = vunpack.c.h.b16 %v2048
        %v2119 = vunpack.c.l.b16 %v2049
        %v2120 = vunpack.c.h.b16 %v2049
        %v2121 = vunpack.c.l.b16 %v2050
        %v2122 = vunpack.c.h.b16 %v2050
        %v2123 = vunpack.c.l.b16 %v2051
        %v2124 = vunpack.c.h.b16 %v2051
        %v2125 = vunpack.c.l.b16 %v2052
        %v2126 = vunpack.c.h.b16 %v2052
        %v2127 = vunpack.c.l.b16 %v2053
        %v2128 = vunpack.c.h.b16 %v2053
        %v2129 = vunpack.c.l.b16 %v2054
        %v2130 = vunpack.c.h.b16 %v2054
        %v2131 = vunpack.c.l.b16 %v2055
        %v2132 = vunpack.c.h.b16 %v2055
        %v2133 = vunpack.c.l.b16 %v2056
        %v2134 = vunpack.c.h.b16 %v2056
        %v2135 = vunpack.c.l.b16 %v2057
        %v2136 = vunpack.c.h.b16 %v2057
        %v2137 = vunpack.c.l.b16 %v2058
        %v2138 = vunpack.c.h.b16 %v2058
        %v2139 = vunpack.c.l.b16 %v2059
        %v2140 = vunpack.c.h.b16 %v2059
        %v2141 = vunpack.c.l.b16 %v2060
        %v2142 = vunpack.c.h.b16 %v2060
        %v2143 = vunpack.c.l.b16 %v2061
        %v2144 = vunpack.c.h.b16 %v2061
        %v2145 = vunpack.c.l.b16 %v2062
        %v2146 = vunpack.c.h.b16 %v2062
        %v2147 = vunpack.c.l.b16 %v2063
        %v2148 = vunpack.c.h.b16 %v2063
        %v2149 = vunpack.c.l.b16 %v2064
        %v2150 = vunpack.c.h.b16 %v2064
        %v2151 = vunpack.c.l.b16 %v2065
        %v2152 = vunpack.c.h.b16 %v2065
        %v2153 = vunpack.c.l.b16 %v2066
        %v2154 = vunpack.c.h.b16 %v2066
        %v2155 = vunpack.c.l.b16 %v2067
        %v2156 = vunpack.c.h.b16 %v2067
        %v2157 = vunpack.c.l.b16 %v2068
        %v2158 = vunpack.c.h.b16 %v2068
        %v2159 = vunpack.c.l.b16 %v2069
        %v2160 = vunpack.c.h.b16 %v2069
        %v2161 = vunpack.c.l.b16 %v2070
        %v2162 = vunpack.c.h.b16 %v2070
        %v2163 = vunpack.c.l.b16 %v2071
        %v2164 = vunpack.c.h.b16 %v2071
        %v2165 = vunpack.c.l.b16 %v2072
        %v2166 = vunpack.c.h.b16 %v2072
        %v2167 = vunpack.c.l.b16 %v2073
        %v2168 = vunpack.c.h.b16 %v2073
        %v2169 = vunpack.c.l.b16 %v2074
        %v2170 = vunpack.c.h.b16 %v2074
        %v2171 = vpack.c.b16 %v2111, %v2107
        %v2172 = vpack.c.b16 %v2112, %v2108
        %v2173 = vpack.c.b16 %v2113, %v2109
        %v2174 = vpack.c.b16 %v2114, %v2110
        %v2175 = vpack.c.b16 %v2119, %v2115
        %v2176 = vpack.c.b16 %v2120, %v2116
        %v2177 = vpack.c.b16 %v2121, %v2117
        %v2178 = vpack.c.b16 %v2122, %v2118
        %v2179 = vpack.c.b16 %v2127, %v2123
        %v2180 = vpack.c.b16 %v2128, %v2124
        %v2181 = vpack.c.b16 %v2129, %v2125
        %v2182 = vpack.c.b16 %v2130, %v2126
        %v2183 = vpack.c.b16 %v2135, %v2131
        %v2184 = vpack.c.b16 %v2136, %v2132
        %v2185 = vpack.c.b16 %v2137, %v2133
        %v2186 = vpack.c.b16 %v2138, %v2134
        %v2187 = vpack.c.b16 %v2143, %v2139
        %v2188 = vpack.c.b16 %v2144, %v2140
        %v2189 = vpack.c.b16 %v2145, %v2141
        %v2190 = vpack.c.b16 %v2146, %v2142
        %v2191 = vpack.c.b16 %v2151, %v2147
        %v2192 = vpack.c.b16 %v2152, %v2148
        %v2193 = vpack.c.b16 %v2153, %v2149
        %v2194 = vpack.c.b16 %v2154, %v2150
        %v2195 = vpack.c.b16 %v2159, %v2155
        %v2196 = vpack.c.b16 %v2160, %v2156
        %v2197 = vpack.c.b16 %v2161, %v2157
        %v2198 = vpack.c.b16 %v2162, %v2158
        %v2199 = vpack.c.b16 %v2167, %v2163
        %v2200 = vpack.c.b16 %v2168, %v2164
        %v2201 = vpack.c.b16 %v2169, %v2165
        %v2202 = vpack.c.b16 %v2170, %v2166
        %2235 = vmatpush.bf16.msra.mxu0 %v2199
        %2236 = vmatpush.bf16.msra.mxu0 %v2195
        %2237 = vmatpush.bf16.msra.mxu0 %v2191
        %2238 = vmatpush.bf16.msra.mxu0 %v2187
        %2239 = vmatpush.bf16.msra.mxu0 %v2183
        %2240 = vmatpush.bf16.msra.mxu0 %v2179
        %2241 = vmatpush.bf16.msra.mxu0 %v2175
        %2242 = vmatpush.bf16.msra.mxu0 %v2171
        %2243 = vmatmul.bf16.gmra.mxu0 %v2042
        %v2244 = vpop.f32.mrf.mxu0
        %v2245 = vadd.f32 0.0, %v2244
        %v2246 = vpop.f32.mrf.mxu0
        %v2247 = vadd.f32 0.0, %v2246
        %2248 = vdwg.mxu0
        %2249 = vmatpush.bf16.msra.mxu0 %v2200
        %2250 = vmatpush.bf16.msra.mxu0 %v2196
        %2251 = vmatpush.bf16.msra.mxu0 %v2192
        %2252 = vmatpush.bf16.msra.mxu0 %v2188
        %2253 = vmatpush.bf16.msra.mxu0 %v2184
        %2254 = vmatpush.bf16.msra.mxu0 %v2180
        %2255 = vmatpush.bf16.msra.mxu0 %v2176
        %2256 = vmatpush.bf16.msra.mxu0 %v2172
        %2257 = vmatmul.bf16.gmra.mxu0 %v2042
        %v2258 = vpop.f32.mrf.mxu0
        %v2259 = vadd.f32 0.0, %v2258
        %v2260 = vpop.f32.mrf.mxu0
        %v2261 = vadd.f32 0.0, %v2260
        %2262 = vdwg.mxu0
        %2263 = vmatpush.bf16.msra.mxu0 %v2201
        %2264 = vmatpush.bf16.msra.mxu0 %v2197
        %2265 = vmatpush.bf16.msra.mxu0 %v2193
        %2266 = vmatpush.bf16.msra.mxu0 %v2189
        %2267 = vmatpush.bf16.msra.mxu0 %v2185
        %2268 = vmatpush.bf16.msra.mxu0 %v2181
        %2269 = vmatpush.bf16.msra.mxu0 %v2177
        %2270 = vmatpush.bf16.msra.mxu0 %v2173
        %2271 = vmatmul.bf16.gmra.mxu0 %v2042
        %v2272 = vpop.f32.mrf.mxu0
        %v2273 = vadd.f32 0.0, %v2272
        %v2274 = vpop.f32.mrf.mxu0
        %v2275 = vadd.f32 0.0, %v2274
        %2276 = vdwg.mxu0
        %2277 = vmatpush.bf16.msra.mxu0 %v2202
        %2278 = vmatpush.bf16.msra.mxu0 %v2198
        %2279 = vmatpush.bf16.msra.mxu0 %v2194
        %2280 = vmatpush.bf16.msra.mxu0 %v2190
        %2281 = vmatpush.bf16.msra.mxu0 %v2186
        %2282 = vmatpush.bf16.msra.mxu0 %v2182
        %2283 = vmatpush.bf16.msra.mxu0 %v2178
        %2284 = vmatpush.bf16.msra.mxu0 %v2174
        %2285 = vmatmul.bf16.gmra.mxu0 %v2042
        %v2286 = vpop.f32.mrf.mxu0
        %v2287 = vadd.f32 0.0, %v2286
        %v2288 = vpop.f32.mrf.mxu0
        %v2289 = vadd.f32 0.0, %v2288
        %2290 = vdwg.mxu0
        %v2291 = vadd.f32 %v2034, %v2245
        %v2292 = vadd.f32 %v2035, %v2259
        %v2293 = vadd.f32 %v2036, %v2273
        %v2294 = vadd.f32 %v2037, %v2287
        %v2295 = vadd.f32 %v2038, %v2247
        %v2296 = vadd.f32 %v2039, %v2261
        %v2297 = vadd.f32 %v2040, %v2275
        %v2298 = vadd.f32 %v2041, %v2289
        %v2299 = vxor.u32 %v2291, 2147483648
        %v2300 = vxor.u32 %v2295, 2147483648
        %v2301 = vmul.f32 %v2299, 1.442695
        %v2302 = vpow.pop %v2301
        %v2303 = vmul.f32 %v2300, 1.442695
        %v2304 = vpow.pop %v2303
        %v2305 = vadd.f32 %v2302, 1.0
        %v2306 = vadd.f32 %v2304, 1.0
        %v2307 = vrcp.pop %v2305
        %v2308 = vmul.f32 %v2305, %v2307
        %v2309 = vsub.f32 1.0, %v2308
        %v2310 = vmul.f32 %v2307, %v2309
        %v2311 = vadd.f32 %v2307, %v2310
        %vm2312 = vweird.f32 %v2305
        %vm2313 = vweird.f32 %v2307
        %vm2314 = vmor %vm2312, %vm2313
        %v2315 = vsel %vm2314, %v2307, %v2311
        %v2316 = vand.u32 2147483647, %v2305
        %vm2317 = vcmp.eq.f32.partialorder %v2316, 8.507059e+37
        %v2318 = vand.u32 %v2305, 2147483648
        %v2319 = vor.u32 1.1754944e-38, %v2318
        %v2320 = vsel %vm2317, %v2319, %v2315
        %v2321 = vmul.f32 1.0, %v2320
        %v2322 = vrcp.pop %v2306
        %v2323 = vmul.f32 %v2306, %v2322
        %v2324 = vsub.f32 1.0, %v2323
        %v2325 = vmul.f32 %v2322, %v2324
        %v2326 = vadd.f32 %v2322, %v2325
        %vm2327 = vweird.f32 %v2306
        %vm2328 = vweird.f32 %v2322
        %vm2329 = vmor %vm2327, %vm2328
        %v2330 = vsel %vm2329, %v2322, %v2326
        %v2331 = vand.u32 2147483647, %v2306
        %vm2332 = vcmp.eq.f32.partialorder %v2331, 8.507059e+37
        %v2333 = vand.u32 %v2306, 2147483648
        %v2334 = vor.u32 1.1754944e-38, %v2333
        %v2335 = vsel %vm2332, %v2334, %v2330
        %v2336 = vmul.f32 1.0, %v2335
        %v2337 = vxor.u32 %v2292, 2147483648
        %v2338 = vxor.u32 %v2296, 2147483648
        %v2339 = vmul.f32 %v2337, 1.442695
        %v2340 = vpow.pop %v2339
        %v2341 = vmul.f32 %v2338, 1.442695
        %v2342 = vpow.pop %v2341
        %v2343 = vadd.f32 %v2340, 1.0
        %v2344 = vadd.f32 %v2342, 1.0
        %v2345 = vrcp.pop %v2343
        %v2346 = vmul.f32 %v2343, %v2345
        %v2347 = vsub.f32 1.0, %v2346
        %v2348 = vmul.f32 %v2345, %v2347
        %v2349 = vadd.f32 %v2345, %v2348
        %vm2350 = vweird.f32 %v2343
        %vm2351 = vweird.f32 %v2345
        %vm2352 = vmor %vm2350, %vm2351
        %v2353 = vsel %vm2352, %v2345, %v2349
        %v2354 = vand.u32 2147483647, %v2343
        %vm2355 = vcmp.eq.f32.partialorder %v2354, 8.507059e+37
        %v2356 = vand.u32 %v2343, 2147483648
        %v2357 = vor.u32 1.1754944e-38, %v2356
        %v2358 = vsel %vm2355, %v2357, %v2353
        %v2359 = vmul.f32 1.0, %v2358
        %v2360 = vrcp.pop %v2344
        %v2361 = vmul.f32 %v2344, %v2360
        %v2362 = vsub.f32 1.0, %v2361
        %v2363 = vmul.f32 %v2360, %v2362
        %v2364 = vadd.f32 %v2360, %v2363
        %vm2365 = vweird.f32 %v2344
        %vm2366 = vweird.f32 %v2360
        %vm2367 = vmor %vm2365, %vm2366
        %v2368 = vsel %vm2367, %v2360, %v2364
        %v2369 = vand.u32 2147483647, %v2344
        %vm2370 = vcmp.eq.f32.partialorder %v2369, 8.507059e+37
        %v2371 = vand.u32 %v2344, 2147483648
        %v2372 = vor.u32 1.1754944e-38, %v2371
        %v2373 = vsel %vm2370, %v2372, %v2368
        %v2374 = vmul.f32 1.0, %v2373
        %v2375 = vtanh.pop %v2293
        %v2376 = vtanh.pop %v2297
        %v2377 = vxor.u32 %v2294, 2147483648
        %v2378 = vxor.u32 %v2298, 2147483648
        %v2379 = vmul.f32 %v2377, 1.442695
        %v2380 = vpow.pop %v2379
        %v2381 = vmul.f32 %v2378, 1.442695
        %v2382 = vpow.pop %v2381
        %v2383 = vadd.f32 %v2380, 1.0
        %v2384 = vadd.f32 %v2382, 1.0
        %v2385 = vrcp.pop %v2383
        %v2386 = vmul.f32 %v2383, %v2385
        %v2387 = vsub.f32 1.0, %v2386
        %v2388 = vmul.f32 %v2385, %v2387
        %v2389 = vadd.f32 %v2385, %v2388
        %vm2390 = vweird.f32 %v2383
        %vm2391 = vweird.f32 %v2385
        %vm2392 = vmor %vm2390, %vm2391
        %v2393 = vsel %vm2392, %v2385, %v2389
        %v2394 = vand.u32 2147483647, %v2383
        %vm2395 = vcmp.eq.f32.partialorder %v2394, 8.507059e+37
        %v2396 = vand.u32 %v2383, 2147483648
        %v2397 = vor.u32 1.1754944e-38, %v2396
        %v2398 = vsel %vm2395, %v2397, %v2393
        %v2399 = vmul.f32 1.0, %v2398
        %v2400 = vrcp.pop %v2384
        %v2401 = vmul.f32 %v2384, %v2400
        %v2402 = vsub.f32 1.0, %v2401
        %v2403 = vmul.f32 %v2400, %v2402
        %v2404 = vadd.f32 %v2400, %v2403
        %vm2405 = vweird.f32 %v2384
        %vm2406 = vweird.f32 %v2400
        %vm2407 = vmor %vm2405, %vm2406
        %v2408 = vsel %vm2407, %v2400, %v2404
        %v2409 = vand.u32 2147483647, %v2384
        %vm2410 = vcmp.eq.f32.partialorder %v2409, 8.507059e+37
        %v2411 = vand.u32 %v2384, 2147483648
        %v2412 = vor.u32 1.1754944e-38, %v2411
        %v2413 = vsel %vm2410, %v2412, %v2408
        %v2414 = vmul.f32 1.0, %v2413
        %v2415 = vmul.f32 %v2359, %v2031
        %v2416 = vmul.f32 %v2374, %v2032
        %v2417 = vmul.f32 %v2321, %v2375
        %v2418 = vmul.f32 %v2336, %v2376
        %v2419 = vadd.f32 %v2415, %v2417
        %v2420 = vadd.f32 %v2416, %v2418
        %v2421 = vtanh.pop %v2419
        %v2422 = vtanh.pop %v2420
        %v2423 = vmul.f32 %v2399, %v2421
        %v2424 = vmul.f32 %v2414, %v2422
        %s2425 = sadd.s32 %s776, 3
        %v2426 = vstv %s2425
        %vm2427 = vcmp.gt.s32.totalorder %v774, %v2426
        %vm2428 = vcmp.gt.s32.totalorder %v775, %v2426
        %v2429 = vsel %vm2427, 1, 0
        %v2430 = vsel %vm2428, 1, 0
        %2431 = vset.pattern.permute.xlu0 0
        %2432 = vperm.xlu0 %2431, %v2429
        %v2433 = vpop.permute.xlu0 %2432
        %2434 = vset.pattern.permute.xlu0 0
        %2435 = vperm.xlu0 %2434, %v2430
        %v2436 = vpop.permute.xlu0 %2435
        %vm2437 = vcmp.eq.s32.totalorder %v2433, 1
        %vm2438 = vcmp.eq.s32.totalorder %v2436, 1
        %v2439 = vsel %vm2437, %v2423, %v2029
        %v2440 = vsel %vm2438, %v2424, %v2030
        %2441 = vst [vmem:[#allocation2] sm:$0xff] %v2439
        %2442 = vst [vmem:[#allocation2 + $0x8] sm:$0xff] %v2440
        %v2443 = vsel %vm2437, %v2419, %v2031
        %v2444 = vsel %vm2438, %v2420, %v2032
        %2445 = vst [vmem:[#allocation3] sm:$0xff] %v2443
        %2446 = vst [vmem:[#allocation3 + $0x8] sm:$0xff] %v2444
        %p2447 = scmp.eq.s32.totalorder %s26, 1
        // Predicated region
        $region57: #{tpu_custom_call.1} parent=43 // pred_check
          %p2448 = pneg %p2447
        $region58: #{tpu_custom_call.1} parent=43 // pred_check_branch
          %2450 = sbr.rel (%p2448) target = $region60
        $region59: #{tpu_custom_call.1} parent=43 // pred_region
          %v2451 = vld [vmem:[#allocation2] sm:$0xff]
          %v2452 = vld [vmem:[#allocation2 + $0x8] sm:$0xff]
          %v2453 = vld [vmem:[%s4] sm:$0x1]
          %v2455 = vperm.slane %v2453, 0
          %v2457 = vmul.f32 %v2451, %v2455
          %v2458 = vmul.f32 %v2452, %v2455
          %2459 = vadd.xlane.f32.xlu0 %v2457
          %v2460 = vpop.xlane.xlu0 %2459
          %2461 = vadd.xlane.f32.xlu0 %v2458
          %v2462 = vpop.xlane.xlu0 %2461
          %v2463 = vld [vmem:[#allocation5] sm:$0x1]
          %v2465 = vperm.slane %v2463, 0
          %v2467 = vadd.f32 %v2460, %v2465
          %v2468 = vadd.f32 %v2462, %v2465
          %vm2469 = vcmask 7168
          %2470 = vst.msk [vmem:[%s342] sm:$0xff] %vm2469, %v2467
          %2471 = vst.msk [vmem:[%s342 + $0x8] sm:$0xff] %vm2469, %v2468
        $region60: #{tpu_custom_call.1} parent=43 // pred_fallthru
          _
        %s2472 = smul.u32 2, %s25
        %p2473 = scmp.lt.s32.totalorder %s2472, 1
        %s2474 = scalar_select %p2473, %s2472, 1
        %s2475 = smul.addr %s2474, 8
        %s2476 = scalar_lea.vmem %s6, %s2475
        // Predicated region
        $region61: #{tpu_custom_call.1} parent=43 // pred_check
          %p2477 = pneg %p189
        $region62: #{tpu_custom_call.1} parent=43 // pred_check_branch
          %2479 = sbr.rel (%p2477) target = $region64
        $region63: #{tpu_custom_call.1} parent=43 // pred_region
          %s2480 = smul.u32 2, %s25
        $region64: #{tpu_custom_call.1} parent=43 // pred_fallthru
          _
        // Predicated region
        $region65: #{tpu_custom_call.1} parent=43 // pred_check
          %p2481 = pneg %p189
        $region66: #{tpu_custom_call.1} parent=43 // pred_check_branch
          %2483 = sbr.rel (%p2481) target = $region68
        $region67: #{tpu_custom_call.1} parent=43 // pred_region
          %s2484 = smul.u32 2, %s25
          %p2485 = scmp.lt.s32.totalorder %s2484, 1
          %s2486 = scalar_select %p2485, %s2484, 1
          %s2487 = smul.addr %s2486, 8
          %s2488 = scalar_lea.vmem %s6, %s2487
        $region68: #{tpu_custom_call.1} parent=43 // pred_fallthru
          _
      $region44: #{tpu_custom_call.1} parent=5 // pred_fallthru
        _
      %p2489 = scmp.le.s32.totalorder 2, %s16
      // Predicated region
      $region69: #{tpu_custom_call.1} parent=5 // pred_check
        %p2490 = pneg %p2489
      $region70: #{tpu_custom_call.1} parent=5 // pred_check_branch
        %2492 = sbr.rel (%p2490) target = $region72
      $region71: #{tpu_custom_call.1} parent=5 // pred_region
        %s2493 = ssub.s32 %s16, 2
      $region72: #{tpu_custom_call.1} parent=5 // pred_fallthru
        _
    $region6: #{tpu_custom_call.1} parent=1 // loop_footer
      %s20 = sadd.s32 1, %s16
    $region7: #{tpu_custom_call.1} parent=1 // loop_footer_branch
      %15 = sbr.rel target = $region3
    $region8: #{tpu_custom_call.1} parent=1 // loop_exit
      _
    %2494 = vsyncpa [#allocation7], 1
    %s2495 = scalar_lea.sflag [#allocation7], 1
    %2496 = vsyncpa %s2495, 1
    %2497 = vsyncpa [#allocation9], 1

</llo_original>
